<compile_context>
chip_gen: v6e
topology: v6e:2x2x1
jax: 0.10.0
libtpu: 0.0.40
codegen_flags: <defaults>
</compile_context>

<pallas_src>
import jax
import jax.numpy as jnp
from jax.experimental import pallas as pl
from jax.experimental.pallas import tpu as pltpu


def _round_up(v: int, m: int) -> int:
    return ((v + m - 1) // m) * m


def _matmul_kernel(x_ref, p_ref, o_ref, acc_ref):
    """(tm, tk) @ (tk, tn), accumulated over the K grid axis in f32 scratch."""

    @pl.when(pl.program_id(2) == 0)
    def _():
        acc_ref[...] = jnp.zeros_like(acc_ref)

    acc_ref[...] += jnp.dot(
        x_ref[...], p_ref[...], preferred_element_type=jnp.float32
    )

    @pl.when(pl.program_id(2) == pl.num_programs(2) - 1)
    def _():
        o_ref[...] = acc_ref[...].astype(o_ref.dtype)


# Below this many MACs the pallas_call launch (+ per-step ~0.35us overhead)
# dominates; XLA's fused dot is strictly faster for the toy shapes.
_MIN_PALLAS_MACS = 128 * 128 * 128


def _tiled_matmul(x, params, out_dtype, *, tm=512, tn=512, tk=512):
    """x:(B,K) @ params:(K,N) -> (B,N) via a tiled, pipelined Pallas kernel."""
    B, K = x.shape
    _, N = params.shape

    # Clamp tiles to the (padded) problem size while keeping (8, 128)
    # alignment and a lane-dense (multiple-of-128) output tile.
    # Footprint @ 512^3 f32: 2x(x tile) + 2x(p tile) + 2x(out tile) + acc
    # ~= 7 MiB, safely below the scoped-VMEM limit on v5e/v6e/v7x.
    tm = min(tm, _round_up(B, 8))
    tn = min(tn, _round_up(N, 128))
    tk = min(tk, _round_up(K, 128))

    Mp, Kp, Np = _round_up(B, tm), _round_up(K, tk), _round_up(N, tn)
    if (Mp, Kp) != (B, K):
        x = jnp.pad(x, ((0, Mp - B), (0, Kp - K)))
    if (Kp, Np) != (K, N):
        params = jnp.pad(params, ((0, Kp - K), (0, Np - N)))

    out = pl.pallas_call(
        _matmul_kernel,
        out_shape=jax.ShapeDtypeStruct((Mp, Np), out_dtype),
        grid_spec=pltpu.PrefetchScalarGridSpec(
            num_scalar_prefetch=0,
            grid=(Mp // tm, Np // tn, Kp // tk),
            in_specs=[
                pl.BlockSpec((tm, tk), lambda i, j, k: (i, k)),
                pl.BlockSpec((tk, tn), lambda i, j, k: (k, j)),
            ],
            out_specs=pl.BlockSpec((tm, tn), lambda i, j, k: (i, j)),
            scratch_shapes=[pltpu.VMEM((tm, tn), jnp.float32)],
        ),
        compiler_params=pltpu.CompilerParams(
            dimension_semantics=("parallel", "parallel", "arbitrary"),
            vmem_limit_bytes=32 * 1024 * 1024,
        ),
    )(x, params)

    if (Mp, Np) != (B, N):
        out = out[:B, :N]
    return out


def wrapped_jax_function_forward(params: jax.Array, x: jax.Array) -> jax.Array:
    """Pallas equivalent of WrappedJaxFunction.forward for
    jax_function = lambda params, x: jnp.dot(x, params)."""
    assert params.ndim == 2, f"params must be (K, N), got {params.shape}"
    K2, N = params.shape

    # Match jnp.dot dtype promotion explicitly (mixed-dtype callers get the
    # same result dtype as the wrapped jax function would produce).
    out_dtype = jnp.result_type(x.dtype, params.dtype)

    orig_shape = x.shape
    x2 = x[None, :] if x.ndim == 1 else x.reshape((-1, x.shape[-1]))
    B, K = x2.shape
    assert K == K2, f"shape mismatch: x {x.shape} vs params {params.shape}"

    # Tiny-problem fallback: pallas_call overhead dominates a sub-us matmul.
    if B * K * N < _MIN_PALLAS_MACS:
        return jnp.dot(x, params)

    out = _tiled_matmul(x2.astype(out_dtype), params.astype(out_dtype), out_dtype)
    return out.reshape(orig_shape[:-1] + (N,))


class WrappedJaxFunctionPallas:
    """Minimal JAX-side analogue of the torch WrappedJaxFunction module:
    holds the (flat) params and applies the wrapped function on __call__."""

    def __init__(self, jax_params: jax.Array):
        self.params = jax_params

    def __call__(self, x: jax.Array) -> jax.Array:
        return wrapped_jax_function_forward(self.params, x)


if __name__ == "__main__":
    key = jax.random.PRNGKey(0)
    k0, k1, k2, k3 = jax.random.split(key, 4)

    # Case 1: docstring-scale toy shapes -> small-shape fallback path
    # (identical to the wrapped jnp.dot, so exact tolerances apply).
    batch, in_f, out_f = 8, 32, 16
    p_small = jax.random.normal(k0, (in_f, out_f), dtype=jnp.float32)
    x_small = jax.random.normal(k1, (batch, in_f), dtype=jnp.float32)
    mod_small = WrappedJaxFunctionPallas(p_small)
    y_small = jax.block_until_ready(mod_small(x_small))
    ref_small = jnp.dot(x_small, p_small)
    assert y_small.shape == ref_small.shape and y_small.dtype == ref_small.dtype
    assert jnp.allclose(y_small, ref_small, atol=1e-5, rtol=1e-5)

    # Case 2: MXU-aligned shapes large enough for the tiled Pallas path
    # (grid has 2 K-steps -> exercises the accumulator init/writeback).
    B, K, N = 256, 1024, 512
    p_big = jax.random.normal(k2, (K, N), dtype=jnp.float32)
    x_big = jax.random.normal(k3, (B, K), dtype=jnp.float32)
    mod_big = WrappedJaxFunctionPallas(p_big)
    y_big = jax.block_until_ready(mod_big(x_big))
    ref_big = jnp.dot(x_big, p_big)
    assert y_big.shape == ref_big.shape and y_big.dtype == ref_big.dtype
    # Loose tolerance: reference jnp.dot may use a reduced-precision MXU path.
    assert jnp.allclose(y_big, ref_big, atol=0.5, rtol=2e-2)

    # Case 3: non-aligned shapes exercise the pad-to-tile / slice-back path.
    B3, K3, N3 = 200, 384, 200
    p3 = jax.random.normal(k0, (K3, N3), dtype=jnp.float32)
    x3 = jax.random.normal(k1, (B3, K3), dtype=jnp.float32)
    y3 = jax.block_until_ready(wrapped_jax_function_forward(p3, x3))
    ref3 = jnp.dot(x3, p3)
    assert y3.shape == ref3.shape and y3.dtype == ref3.dtype
    assert jnp.allclose(y3, ref3, atol=0.5, rtol=2e-2)

    print("KERNEL_OK")
</pallas_src>

<mosaic_0001>
module attributes {stable_mosaic.version = 11 : i64} {
  func.func @_matmul_kernel(%arg0: i32, %arg1: i32, %arg2: i32, %arg3: memref<256x512xf32, #tpu.memory_space<vmem>>, %arg4: memref<512x512xf32, #tpu.memory_space<vmem>>, %arg5: memref<256x512xf32, #tpu.memory_space<vmem>>, %arg6: memref<256x512xf32, #tpu.memory_space<vmem>>) attributes {dimension_semantics = [#tpu.dimension_semantics<parallel>, #tpu.dimension_semantics<parallel>, #tpu.dimension_semantics<arbitrary>], iteration_bounds = array<i64: 1, 1, 2>, scalar_prefetch = 0 : i64, scratch_operands = 1 : i64, tpu.core_type = #tpu.core_type<tc>, window_params = [{transform_indices = @transform_0, window_bounds = array<i64: 256, 512>}, {transform_indices = @transform_1, window_bounds = array<i64: 512, 512>}, {transform_indices = @transform_2, window_bounds = array<i64: 256, 512>}]} {
    %c0_i32 = arith.constant 0 : i32
    %0 = arith.cmpi eq, %arg2, %c0_i32 : i32
    %1 = arith.extui %0 : i1 to i32
    %c0_i32_0 = arith.constant 0 : i32
    %2 = arith.cmpi ne, %1, %c0_i32_0 : i32
    scf.if %2 {
      %cst_9 = arith.constant 0.000000e+00 : f32
      %12 = vector.broadcast %cst_9 : f32 to vector<256x512xf32>
      %c0_10 = arith.constant 0 : index
      %c0_11 = arith.constant 0 : index
      %13 = vector.load %arg6[%c0_10, %c0_11] : memref<256x512xf32, #tpu.memory_space<vmem>>, vector<256x512xf32>
      tpu.vector_store %arg6[%c0_10, %c0_11], %12 {strides = array<i32>} : memref<256x512xf32, #tpu.memory_space<vmem>>, vector<256x512xf32>,
    } else {
    }
    %c0 = arith.constant 0 : index
    %c0_1 = arith.constant 0 : index
    %3 = vector.load %arg6[%c0, %c0_1] : memref<256x512xf32, #tpu.memory_space<vmem>>, vector<256x512xf32>
    %c0_2 = arith.constant 0 : index
    %c0_3 = arith.constant 0 : index
    %4 = vector.load %arg3[%c0_2, %c0_3] : memref<256x512xf32, #tpu.memory_space<vmem>>, vector<256x512xf32>
    %c0_4 = arith.constant 0 : index
    %c0_5 = arith.constant 0 : index
    %5 = vector.load %arg4[%c0_4, %c0_5] : memref<512x512xf32, #tpu.memory_space<vmem>>, vector<512x512xf32>
    %cst = arith.constant dense<0.000000e+00> : vector<256x512xf32>
    %6 = tpu.matmul %4, %5, %cst {dimension_numbers = #tpu.dot_dimension_numbers<[1], [0], [0], [1], [0, 0, 1, 1], [], []>} : vector<256x512xf32>, vector<512x512xf32>, vector<256x512xf32> -> vector<256x512xf32>
    %7 = arith.addf %3, %6 : vector<256x512xf32>
    %c0_6 = arith.constant 0 : index
    %c0_7 = arith.constant 0 : index
    %8 = vector.load %arg6[%c0_6, %c0_7] : memref<256x512xf32, #tpu.memory_space<vmem>>, vector<256x512xf32>
    tpu.vector_store %arg6[%c0_6, %c0_7], %7 {strides = array<i32>} : memref<256x512xf32, #tpu.memory_space<vmem>>, vector<256x512xf32>,
    %c1_i32 = arith.constant 1 : i32
    %9 = arith.cmpi eq, %arg2, %c1_i32 : i32
    %10 = arith.extui %9 : i1 to i32
    %c0_i32_8 = arith.constant 0 : i32
    %11 = arith.cmpi ne, %10, %c0_i32_8 : i32
    scf.if %11 {
      %c0_9 = arith.constant 0 : index
      %c0_10 = arith.constant 0 : index
      %12 = vector.load %arg6[%c0_9, %c0_10] : memref<256x512xf32, #tpu.memory_space<vmem>>, vector<256x512xf32>
      %c0_11 = arith.constant 0 : index
      %c0_12 = arith.constant 0 : index
      %13 = vector.load %arg5[%c0_11, %c0_12] : memref<256x512xf32, #tpu.memory_space<vmem>>, vector<256x512xf32>
      tpu.vector_store %arg5[%c0_11, %c0_12], %12 {strides = array<i32>} : memref<256x512xf32, #tpu.memory_space<vmem>>, vector<256x512xf32>,
    } else {
    }
    return
  }
  func.func @transform_0(%arg0: i32, %arg1: i32, %arg2: i32) -> (i32, i32) {
    %c0_i32 = arith.constant 0 : i32
    return %arg0, %arg2 : i32, i32
  }
  func.func @transform_1(%arg0: i32, %arg1: i32, %arg2: i32) -> (i32, i32) {
    %c0_i32 = arith.constant 0 : i32
    return %arg2, %arg1 : i32, i32
  }
  func.func @transform_2(%arg0: i32, %arg1: i32, %arg2: i32) -> (i32, i32) {
    %c0_i32 = arith.constant 0 : i32
    return %arg0, %arg1 : i32, i32
  }
}

</mosaic_0001>

<llo_original>
// kernel: tpu_custom_call.1
$region0: #{tpu_custom_call.1}
  #allocation0 [shape = 'u32[]', space=smem, size = 0x4, offset = 0x4, fixed_abs, tag = 'smem constant byte address 0x4 - core index']
  #allocation1 [shape = 'u32[144,128]{1,0:T(1,128)}', space=vmem, size = 0x12000, scoped, tag = 'internal scratch']
  #allocation2 [shape = 'f32[256,512]{1,0:T(8,128)}', space=vmem, size = 0x80000, scoped, tag = 'scratch operand']
  %s0 = inlined_call_operand.hbm [shape: f32[256,1024], index: 0, kind: input, shape index: {}]
  %s1 = inlined_call_operand.hbm [shape: f32[1024,512], index: 1, kind: input, shape index: {}]
  %s2 = inlined_call_operand.hbm [shape: f32[256,512], index: 2, kind: output, shape index: {}]
  %s3 = sld [smem:[#allocation0]]
  $region57: #{tpu_custom_call.1} parent=0
    _
  %s5 = ssub.s32 1, %s3
  %s6 = scalar_select 0, %s5, %s3
  $region1: #{tpu_custom_call.1} parent=0
    #allocation3 [shape = 'u8[1048576]{0}', space=vmem, size = 0x100000, scoped, tag = 'input window, operand 0']
    #allocation4 [shape = 's32[2]{0}', space=sflag, size = 0x8, scoped, tag = 'scoped memory for tpu_custom_call.1']
    #allocation5 [shape = 's32[2]{0}', space=sflag, size = 0x8, scoped, tag = 'scoped memory for tpu_custom_call.1']
    #allocation6 [shape = 'u8[2097152]{0}', space=vmem, size = 0x200000, scoped, tag = 'input window, operand 1']
    #allocation7 [shape = 's32[2]{0}', space=sflag, size = 0x8, scoped, tag = 'scoped memory for tpu_custom_call.1']
    #allocation8 [shape = 'u8[524288]{0}', space=vmem, size = 0x80000, scoped, tag = 'output window, operand 0, single buffered']
    %7 = vsyncpa [#allocation4], 0
    %s8 = scalar_lea.sflag [#allocation4], 1
    %9 = vsyncpa %s8, 0
    %10 = vsyncpa [#allocation7], 0
    %s11 = scalar_lea.sflag [#allocation7], 1
    %12 = vsyncpa %s11, 0
    %13 = vsyncpa [#allocation5], 0
    loop: start=0, step=1, limit=4
    $region2: #{tpu_custom_call.1} parent=1 // loop_pre_header
      _
    $region3: #{tpu_custom_call.1} parent=1 // loop_header
      %s15 = sphi 0, %s19
      %p16 = scmp.ge.s32.totalorder %s15, 4
      %s22 = sphi 0, %s41
      %s23 = sphi 0, %s37
      %s24 = sphi 0, %s33
      %s25 = sphi 0, %s22
      %s26 = sphi 0, %s23
      %s27 = sphi 0, %s24
      %s28 = sphi 0, %s25
      %s29 = sphi 0, %s26
      %s30 = sphi 0, %s27
      %s46 = sphi 0, %s48
      %s49 = sphi 0, %s46
      %s50 = sphi 0, %s49
      %s66 = sphi 0, %s50
      %s74 = sphi 0, %s76
      %s77 = sphi 0, %s74
      %s78 = sphi 0, %s77
      %s94 = sphi 0, %s78
      %s102 = sphi 0, %s104
      %s105 = sphi 0, %s102
      %s106 = sphi 0, %s105
      %s122 = sphi 0, %s106
    $region4: #{tpu_custom_call.1} parent=1 // loop_header_branch
      %18 = sbr.rel (%p16) target = $region8
    $region5: #{tpu_custom_call.1} parent=1 // loop_body
      %s20 = ssub.s32 %s15, 1
      %s21 = ssub.s32 %s15, 2
      %s31 = sadd.s32 1, %s24
      %p32 = scmp.ge.s32.totalorder %s31, 2
      %s33 = scalar_select %p32, 0, %s31
      %s34 = sadd.s32 1, %s23
      %s35 = scalar_select %p32, %s34, %s23
      %p36 = scmp.ge.s32.totalorder %s35, 1
      %s37 = scalar_select %p36, 0, %s35
      %s38 = sadd.s32 1, %s22
      %s39 = scalar_select %p36, %s38, %s22
      %p40 = scmp.ge.s32.totalorder %s39, 1
      %s41 = scalar_select %p40, 0, %s39
      %s42 = ssub.s32 %s22, %s41
      %s43 = ssub.s32 %s24, %s33
      %s44 = sor.u32 %s42, %s43
      %p45 = scmp.eq.s32.totalorder %s44, 0
      %s47 = sadd.s32 %s46, 1
      %s48 = scalar_select %p45, %s46, %s47
      %p51 = pneg %p45
      %p52 = scmp.eq.s32.totalorder %s15, 1
      %p53 = por %p51, %p52
      %p54 = scmp.ne.s32.totalorder %s46, %s49
      %p55 = scmp.eq.s32.totalorder %s15, 0
      %p56 = por %p54, %p55
      %p57 = scmp.ne.s32.totalorder %s46, %s49
      %p58 = scmp.eq.s32.totalorder %s20, 1
      %p59 = por %p57, %p58
      %p60 = scmp.ne.s32.totalorder %s49, %s50
      %p61 = scmp.eq.s32.totalorder %s20, 0
      %p62 = por %p60, %p61
      %p63 = scmp.ne.s32.totalorder %s49, %s50
      %p64 = scmp.eq.s32.totalorder %s21, 1
      %p65 = por %p63, %p64
      %p67 = scmp.ne.s32.totalorder %s50, %s66
      %p68 = scmp.eq.s32.totalorder %s21, 0
      %p69 = por %p67, %p68
      %s70 = ssub.s32 %s24, %s33
      %s71 = ssub.s32 %s23, %s37
      %s72 = sor.u32 %s70, %s71
      %p73 = scmp.eq.s32.totalorder %s72, 0
      %s75 = sadd.s32 %s74, 1
      %s76 = scalar_select %p73, %s74, %s75
      %p79 = pneg %p73
      %p80 = scmp.eq.s32.totalorder %s15, 1
      %p81 = por %p79, %p80
      %p82 = scmp.ne.s32.totalorder %s74, %s77
      %p83 = scmp.eq.s32.totalorder %s15, 0
      %p84 = por %p82, %p83
      %p85 = scmp.ne.s32.totalorder %s74, %s77
      %p86 = scmp.eq.s32.totalorder %s20, 1
      %p87 = por %p85, %p86
      %p88 = scmp.ne.s32.totalorder %s77, %s78
      %p89 = scmp.eq.s32.totalorder %s20, 0
      %p90 = por %p88, %p89
      %p91 = scmp.ne.s32.totalorder %s77, %s78
      %p92 = scmp.eq.s32.totalorder %s21, 1
      %p93 = por %p91, %p92
      %p95 = scmp.ne.s32.totalorder %s78, %s94
      %p96 = scmp.eq.s32.totalorder %s21, 0
      %p97 = por %p95, %p96
      %s98 = ssub.s32 %s22, %s41
      %s99 = ssub.s32 %s23, %s37
      %s100 = sor.u32 %s98, %s99
      %p101 = scmp.eq.s32.totalorder %s100, 0
      %s103 = sadd.s32 %s102, 1
      %s104 = scalar_select %p101, %s102, %s103
      %p107 = pneg %p101
      %p108 = scmp.eq.s32.totalorder %s15, 1
      %p109 = por %p107, %p108
      %p110 = scmp.ne.s32.totalorder %s102, %s105
      %p111 = scmp.eq.s32.totalorder %s15, 0
      %p112 = por %p110, %p111
      %p113 = scmp.ne.s32.totalorder %s102, %s105
      %p114 = scmp.eq.s32.totalorder %s20, 1
      %p115 = por %p113, %p114
      %p116 = scmp.ne.s32.totalorder %s105, %s106
      %p117 = scmp.eq.s32.totalorder %s20, 0
      %p118 = por %p116, %p117
      %p119 = scmp.ne.s32.totalorder %s105, %s106
      %p120 = scmp.eq.s32.totalorder %s21, 1
      %p121 = por %p119, %p120
      %p123 = scmp.ne.s32.totalorder %s106, %s122
      %p124 = scmp.eq.s32.totalorder %s21, 0
      %p125 = por %p123, %p124
      %p126 = scmp.le.s32.totalorder 1, %s15
      %p127 = scmp.lt.s32.totalorder %s15, 3
      %p128 = pnand %p126, %p127
      %p129 = pneg %p128
      // Predicated region
      $region9: #{tpu_custom_call.1} parent=5 // pred_check
        _
      $region10: #{tpu_custom_call.1} parent=5 // pred_check_branch
        %131 = sbr.rel (%p128) target = $region12
      $region11: #{tpu_custom_call.1} parent=5 // pred_region
        %s132 = ssub.s32 %s15, 1
      $region12: #{tpu_custom_call.1} parent=5 // pred_fallthru
        _
      %p133 = scmp.lt.s32.totalorder %s15, 2
      // Predicated region
      $region13: #{tpu_custom_call.1} parent=5 // pred_check
        %p134 = pneg %p133
      $region14: #{tpu_custom_call.1} parent=5 // pred_check_branch
        %136 = sbr.rel (%p134) target = $region16
      $region15: #{tpu_custom_call.1} parent=5 // pred_region
        // Predicated region
        $region17: #{tpu_custom_call.1} parent=15 // pred_check
          %p137 = pneg %p56
        $region18: #{tpu_custom_call.1} parent=15 // pred_check_branch
          %139 = sbr.rel (%p137) target = $region20
        $region19: #{tpu_custom_call.1} parent=15 // pred_region
          %s140 = sand.u32 %s46, 1
          %s141 = scalar_lea.sflag [#allocation4], %s140
          %s142 = sand.u32 %s46, 1
          %s143 = smul.addr %s142, 1024
          %s144 = scalar_lea.vmem [#allocation3], %s143
          %s145 = smul.u32 32, %s22
          %s146 = smul.u32 4, %s24
          %s148 = ssub.s32 16384, 16384
          %149 = vsyncadd %s141, %s148
          %s150 = smul.addr %s145, 8
          %s151 = sadd.s32 %s146, %s150
          %s152 = smul.addr %s151, 128
          %s153 = scalar_lea.hbm %s0, %s152
          %s154 = sshll.u32 %s144, 4
          %s155 = int_to_ptr.vmem [resolvable:$true] %s154
          %160 = dma.hbm_to_vmem [thread:$0]  %s153, 16384, %s155, %s141, 1024, 512, 32
        $region20: #{tpu_custom_call.1} parent=15 // pred_fallthru
          _
        // Predicated region
        $region21: #{tpu_custom_call.1} parent=15 // pred_check
          %p161 = pneg %p84
        $region22: #{tpu_custom_call.1} parent=15 // pred_check_branch
          %163 = sbr.rel (%p161) target = $region24
        $region23: #{tpu_custom_call.1} parent=15 // pred_region
          %s164 = sand.u32 %s74, 1
          %s165 = scalar_lea.sflag [#allocation7], %s164
          %s166 = sand.u32 %s74, 1
          %s167 = smul.addr %s166, 2048
          %s168 = scalar_lea.vmem [#allocation6], %s167
          %s169 = smul.u32 64, %s24
          %s170 = smul.u32 4, %s23
          %s172 = ssub.s32 32768, 32768
          %173 = vsyncadd %s165, %s172
          %s174 = smul.addr %s169, 4
          %s175 = sadd.s32 %s170, %s174
          %s176 = smul.addr %s175, 128
          %s177 = scalar_lea.hbm %s1, %s176
          %s178 = sshll.u32 %s168, 4
          %s179 = int_to_ptr.vmem [resolvable:$true] %s178
          %184 = dma.hbm_to_vmem [thread:$0]  %s177, 32768, %s179, %s165, 512, 512, 32
        $region24: #{tpu_custom_call.1} parent=15 // pred_fallthru
          _
      $region16: #{tpu_custom_call.1} parent=5 // pred_fallthru
        _
      %p185 = scmp.le.s32.totalorder 1, %s15
      %p186 = scmp.lt.s32.totalorder %s15, 3
      %p187 = pnand %p185, %p186
      %p188 = pneg %p187
      // Predicated region
      $region25: #{tpu_custom_call.1} parent=5 // pred_check
        _
      $region26: #{tpu_custom_call.1} parent=5 // pred_check_branch
        %190 = sbr.rel (%p187) target = $region28
      $region27: #{tpu_custom_call.1} parent=5 // pred_region
        %s191 = ssub.s32 %s15, 1
        %s192 = sand.u32 %s49, 1
        %s193 = scalar_lea.sflag [#allocation4], %s192
        %s194 = sand.u32 %s49, 1
        %s195 = smul.addr %s194, 1024
        %s196 = scalar_lea.vmem [#allocation3], %s195
        // Predicated region
        $region29: #{tpu_custom_call.1} parent=27 // pred_check
          %p197 = pneg %p62
        $region30: #{tpu_custom_call.1} parent=27 // pred_check_branch
          %199 = sbr.rel (%p197) target = $region32
        $region31: #{tpu_custom_call.1} parent=27 // pred_region
          %200 = dma.done %s193, 16384
        $region32: #{tpu_custom_call.1} parent=27 // pred_fallthru
          _
        %s201 = sand.u32 %s77, 1
        %s202 = scalar_lea.sflag [#allocation7], %s201
        %s203 = sand.u32 %s77, 1
        %s204 = smul.addr %s203, 2048
        %s205 = scalar_lea.vmem [#allocation6], %s204
        // Predicated region
        $region33: #{tpu_custom_call.1} parent=27 // pred_check
          %p206 = pneg %p90
        $region34: #{tpu_custom_call.1} parent=27 // pred_check_branch
          %208 = sbr.rel (%p206) target = $region36
        $region35: #{tpu_custom_call.1} parent=27 // pred_region
          %209 = dma.done %s202, 32768
        $region36: #{tpu_custom_call.1} parent=27 // pred_fallthru
          _
        %s210 = sand.u32 %s49, 1
        %s211 = scalar_lea.sflag [#allocation4], %s210
        %s212 = sand.u32 %s49, 1
        %s213 = smul.addr %s212, 1024
        %s214 = scalar_lea.vmem [#allocation3], %s213
        %p215 = pneg %p62
        %p216 = pneg %p59
        %s217 = sand.u32 %s77, 1
        %s218 = scalar_lea.sflag [#allocation7], %s217
        %s219 = sand.u32 %s77, 1
        %s220 = smul.addr %s219, 2048
        %s221 = scalar_lea.vmem [#allocation6], %s220
        %p222 = pneg %p90
        %p223 = pneg %p87
        %p224 = pneg %p118
        %p225 = pneg %p115
        %s226 = smul.u32 32, %s25
        %s227 = smul.u32 4, %s27
        %s228 = smul.u32 64, %s27
        %s229 = smul.u32 4, %s26
        %s230 = smul.u32 32, %s25
        %s231 = smul.u32 4, %s26
        %p232 = scmp.eq.s32.totalorder %s27, 0
        // Predicated region
        $region37: #{tpu_custom_call.1} parent=27 // pred_check
          %p233 = pneg %p232
        $region38: #{tpu_custom_call.1} parent=27 // pred_check_branch
          %235 = sbr.rel (%p233) target = $region40
        $region39: #{tpu_custom_call.1} parent=27 // pred_region
          %236 = vst [vmem:[#allocation2] sm:$0xff] 0.0
          %237 = vst [vmem:[#allocation2 + $0x8] sm:$0xff] 0.0
          %238 = vst [vmem:[#allocation2 + $0x10] sm:$0xff] 0.0
          %239 = vst [vmem:[#allocation2 + $0x18] sm:$0xff] 0.0
          %240 = vst [vmem:[#allocation2 + $0x20] sm:$0xff] 0.0
          %241 = vst [vmem:[#allocation2 + $0x28] sm:$0xff] 0.0
          %242 = vst [vmem:[#allocation2 + $0x30] sm:$0xff] 0.0
          %243 = vst [vmem:[#allocation2 + $0x38] sm:$0xff] 0.0
          %244 = vst [vmem:[#allocation2 + $0x40] sm:$0xff] 0.0
          %245 = vst [vmem:[#allocation2 + $0x48] sm:$0xff] 0.0
          %246 = vst [vmem:[#allocation2 + $0x50] sm:$0xff] 0.0
          %247 = vst [vmem:[#allocation2 + $0x58] sm:$0xff] 0.0
          %248 = vst [vmem:[#allocation2 + $0x60] sm:$0xff] 0.0
          %249 = vst [vmem:[#allocation2 + $0x68] sm:$0xff] 0.0
          %250 = vst [vmem:[#allocation2 + $0x70] sm:$0xff] 0.0
          %251 = vst [vmem:[#allocation2 + $0x78] sm:$0xff] 0.0
          %252 = vst [vmem:[#allocation2 + $0x80] sm:$0xff] 0.0
          %253 = vst [vmem:[#allocation2 + $0x88] sm:$0xff] 0.0
          %254 = vst [vmem:[#allocation2 + $0x90] sm:$0xff] 0.0
          %255 = vst [vmem:[#allocation2 + $0x98] sm:$0xff] 0.0
          %256 = vst [vmem:[#allocation2 + $0xa0] sm:$0xff] 0.0
          %257 = vst [vmem:[#allocation2 + $0xa8] sm:$0xff] 0.0
          %258 = vst [vmem:[#allocation2 + $0xb0] sm:$0xff] 0.0
          %259 = vst [vmem:[#allocation2 + $0xb8] sm:$0xff] 0.0
          %260 = vst [vmem:[#allocation2 + $0xc0] sm:$0xff] 0.0
          %261 = vst [vmem:[#allocation2 + $0xc8] sm:$0xff] 0.0
          %262 = vst [vmem:[#allocation2 + $0xd0] sm:$0xff] 0.0
          %263 = vst [vmem:[#allocation2 + $0xd8] sm:$0xff] 0.0
          %264 = vst [vmem:[#allocation2 + $0xe0] sm:$0xff] 0.0
          %265 = vst [vmem:[#allocation2 + $0xe8] sm:$0xff] 0.0
          %266 = vst [vmem:[#allocation2 + $0xf0] sm:$0xff] 0.0
          %267 = vst [vmem:[#allocation2 + $0xf8] sm:$0xff] 0.0
          %268 = vst [vmem:[#allocation2 + $0x100] sm:$0xff] 0.0
          %269 = vst [vmem:[#allocation2 + $0x108] sm:$0xff] 0.0
          %270 = vst [vmem:[#allocation2 + $0x110] sm:$0xff] 0.0
          %271 = vst [vmem:[#allocation2 + $0x118] sm:$0xff] 0.0
          %272 = vst [vmem:[#allocation2 + $0x120] sm:$0xff] 0.0
          %273 = vst [vmem:[#allocation2 + $0x128] sm:$0xff] 0.0
          %274 = vst [vmem:[#allocation2 + $0x130] sm:$0xff] 0.0
          %275 = vst [vmem:[#allocation2 + $0x138] sm:$0xff] 0.0
          %276 = vst [vmem:[#allocation2 + $0x140] sm:$0xff] 0.0
          %277 = vst [vmem:[#allocation2 + $0x148] sm:$0xff] 0.0
          %278 = vst [vmem:[#allocation2 + $0x150] sm:$0xff] 0.0
          %279 = vst [vmem:[#allocation2 + $0x158] sm:$0xff] 0.0
          %280 = vst [vmem:[#allocation2 + $0x160] sm:$0xff] 0.0
          %281 = vst [vmem:[#allocation2 + $0x168] sm:$0xff] 0.0
          %282 = vst [vmem:[#allocation2 + $0x170] sm:$0xff] 0.0
          %283 = vst [vmem:[#allocation2 + $0x178] sm:$0xff] 0.0
          %284 = vst [vmem:[#allocation2 + $0x180] sm:$0xff] 0.0
          %285 = vst [vmem:[#allocation2 + $0x188] sm:$0xff] 0.0
          %286 = vst [vmem:[#allocation2 + $0x190] sm:$0xff] 0.0
          %287 = vst [vmem:[#allocation2 + $0x198] sm:$0xff] 0.0
          %288 = vst [vmem:[#allocation2 + $0x1a0] sm:$0xff] 0.0
          %289 = vst [vmem:[#allocation2 + $0x1a8] sm:$0xff] 0.0
          %290 = vst [vmem:[#allocation2 + $0x1b0] sm:$0xff] 0.0
          %291 = vst [vmem:[#allocation2 + $0x1b8] sm:$0xff] 0.0
          %292 = vst [vmem:[#allocation2 + $0x1c0] sm:$0xff] 0.0
          %293 = vst [vmem:[#allocation2 + $0x1c8] sm:$0xff] 0.0
          %294 = vst [vmem:[#allocation2 + $0x1d0] sm:$0xff] 0.0
          %295 = vst [vmem:[#allocation2 + $0x1d8] sm:$0xff] 0.0
          %296 = vst [vmem:[#allocation2 + $0x1e0] sm:$0xff] 0.0
          %297 = vst [vmem:[#allocation2 + $0x1e8] sm:$0xff] 0.0
          %298 = vst [vmem:[#allocation2 + $0x1f0] sm:$0xff] 0.0
          %299 = vst [vmem:[#allocation2 + $0x1f8] sm:$0xff] 0.0
          %300 = vst [vmem:[#allocation2 + $0x200] sm:$0xff] 0.0
          %301 = vst [vmem:[#allocation2 + $0x208] sm:$0xff] 0.0
          %302 = vst [vmem:[#allocation2 + $0x210] sm:$0xff] 0.0
          %303 = vst [vmem:[#allocation2 + $0x218] sm:$0xff] 0.0
          %304 = vst [vmem:[#allocation2 + $0x220] sm:$0xff] 0.0
          %305 = vst [vmem:[#allocation2 + $0x228] sm:$0xff] 0.0
          %306 = vst [vmem:[#allocation2 + $0x230] sm:$0xff] 0.0
          %307 = vst [vmem:[#allocation2 + $0x238] sm:$0xff] 0.0
          %308 = vst [vmem:[#allocation2 + $0x240] sm:$0xff] 0.0
          %309 = vst [vmem:[#allocation2 + $0x248] sm:$0xff] 0.0
          %310 = vst [vmem:[#allocation2 + $0x250] sm:$0xff] 0.0
          %311 = vst [vmem:[#allocation2 + $0x258] sm:$0xff] 0.0
          %312 = vst [vmem:[#allocation2 + $0x260] sm:$0xff] 0.0
          %313 = vst [vmem:[#allocation2 + $0x268] sm:$0xff] 0.0
          %314 = vst [vmem:[#allocation2 + $0x270] sm:$0xff] 0.0
          %315 = vst [vmem:[#allocation2 + $0x278] sm:$0xff] 0.0
          %316 = vst [vmem:[#allocation2 + $0x280] sm:$0xff] 0.0
          %317 = vst [vmem:[#allocation2 + $0x288] sm:$0xff] 0.0
          %318 = vst [vmem:[#allocation2 + $0x290] sm:$0xff] 0.0
          %319 = vst [vmem:[#allocation2 + $0x298] sm:$0xff] 0.0
          %320 = vst [vmem:[#allocation2 + $0x2a0] sm:$0xff] 0.0
          %321 = vst [vmem:[#allocation2 + $0x2a8] sm:$0xff] 0.0
          %322 = vst [vmem:[#allocation2 + $0x2b0] sm:$0xff] 0.0
          %323 = vst [vmem:[#allocation2 + $0x2b8] sm:$0xff] 0.0
          %324 = vst [vmem:[#allocation2 + $0x2c0] sm:$0xff] 0.0
          %325 = vst [vmem:[#allocation2 + $0x2c8] sm:$0xff] 0.0
          %326 = vst [vmem:[#allocation2 + $0x2d0] sm:$0xff] 0.0
          %327 = vst [vmem:[#allocation2 + $0x2d8] sm:$0xff] 0.0
          %328 = vst [vmem:[#allocation2 + $0x2e0] sm:$0xff] 0.0
          %329 = vst [vmem:[#allocation2 + $0x2e8] sm:$0xff] 0.0
          %330 = vst [vmem:[#allocation2 + $0x2f0] sm:$0xff] 0.0
          %331 = vst [vmem:[#allocation2 + $0x2f8] sm:$0xff] 0.0
          %332 = vst [vmem:[#allocation2 + $0x300] sm:$0xff] 0.0
          %333 = vst [vmem:[#allocation2 + $0x308] sm:$0xff] 0.0
          %334 = vst [vmem:[#allocation2 + $0x310] sm:$0xff] 0.0
          %335 = vst [vmem:[#allocation2 + $0x318] sm:$0xff] 0.0
          %336 = vst [vmem:[#allocation2 + $0x320] sm:$0xff] 0.0
          %337 = vst [vmem:[#allocation2 + $0x328] sm:$0xff] 0.0
          %338 = vst [vmem:[#allocation2 + $0x330] sm:$0xff] 0.0
          %339 = vst [vmem:[#allocation2 + $0x338] sm:$0xff] 0.0
          %340 = vst [vmem:[#allocation2 + $0x340] sm:$0xff] 0.0
          %341 = vst [vmem:[#allocation2 + $0x348] sm:$0xff] 0.0
          %342 = vst [vmem:[#allocation2 + $0x350] sm:$0xff] 0.0
          %343 = vst [vmem:[#allocation2 + $0x358] sm:$0xff] 0.0
          %344 = vst [vmem:[#allocation2 + $0x360] sm:$0xff] 0.0
          %345 = vst [vmem:[#allocation2 + $0x368] sm:$0xff] 0.0
          %346 = vst [vmem:[#allocation2 + $0x370] sm:$0xff] 0.0
          %347 = vst [vmem:[#allocation2 + $0x378] sm:$0xff] 0.0
          %348 = vst [vmem:[#allocation2 + $0x380] sm:$0xff] 0.0
          %349 = vst [vmem:[#allocation2 + $0x388] sm:$0xff] 0.0
          %350 = vst [vmem:[#allocation2 + $0x390] sm:$0xff] 0.0
          %351 = vst [vmem:[#allocation2 + $0x398] sm:$0xff] 0.0
          %352 = vst [vmem:[#allocation2 + $0x3a0] sm:$0xff] 0.0
          %353 = vst [vmem:[#allocation2 + $0x3a8] sm:$0xff] 0.0
          %354 = vst [vmem:[#allocation2 + $0x3b0] sm:$0xff] 0.0
          %355 = vst [vmem:[#allocation2 + $0x3b8] sm:$0xff] 0.0
          %356 = vst [vmem:[#allocation2 + $0x3c0] sm:$0xff] 0.0
          %357 = vst [vmem:[#allocation2 + $0x3c8] sm:$0xff] 0.0
          %358 = vst [vmem:[#allocation2 + $0x3d0] sm:$0xff] 0.0
          %359 = vst [vmem:[#allocation2 + $0x3d8] sm:$0xff] 0.0
          %360 = vst [vmem:[#allocation2 + $0x3e0] sm:$0xff] 0.0
          %361 = vst [vmem:[#allocation2 + $0x3e8] sm:$0xff] 0.0
          %362 = vst [vmem:[#allocation2 + $0x3f0] sm:$0xff] 0.0
          %363 = vst [vmem:[#allocation2 + $0x3f8] sm:$0xff] 0.0
        $region40: #{tpu_custom_call.1} parent=27 // pred_fallthru
          _
        %v364 = vld [vmem:[#allocation2] sm:$0xff]
        %v365 = vld [vmem:[#allocation2 + $0x8] sm:$0xff]
        %v366 = vld [vmem:[#allocation2 + $0x10] sm:$0xff]
        %v367 = vld [vmem:[#allocation2 + $0x18] sm:$0xff]
        %v368 = vld [vmem:[#allocation2 + $0x20] sm:$0xff]
        %v369 = vld [vmem:[#allocation2 + $0x28] sm:$0xff]
        %v370 = vld [vmem:[#allocation2 + $0x30] sm:$0xff]
        %v371 = vld [vmem:[#allocation2 + $0x38] sm:$0xff]
        %v372 = vld [vmem:[#allocation2 + $0x40] sm:$0xff]
        %v373 = vld [vmem:[#allocation2 + $0x48] sm:$0xff]
        %v374 = vld [vmem:[#allocation2 + $0x50] sm:$0xff]
        %v375 = vld [vmem:[#allocation2 + $0x58] sm:$0xff]
        %v376 = vld [vmem:[#allocation2 + $0x60] sm:$0xff]
        %v377 = vld [vmem:[#allocation2 + $0x68] sm:$0xff]
        %v378 = vld [vmem:[#allocation2 + $0x70] sm:$0xff]
        %v379 = vld [vmem:[#allocation2 + $0x78] sm:$0xff]
        %v380 = vld [vmem:[#allocation2 + $0x80] sm:$0xff]
        %v381 = vld [vmem:[#allocation2 + $0x88] sm:$0xff]
        %v382 = vld [vmem:[#allocation2 + $0x90] sm:$0xff]
        %v383 = vld [vmem:[#allocation2 + $0x98] sm:$0xff]
        %v384 = vld [vmem:[#allocation2 + $0xa0] sm:$0xff]
        %v385 = vld [vmem:[#allocation2 + $0xa8] sm:$0xff]
        %v386 = vld [vmem:[#allocation2 + $0xb0] sm:$0xff]
        %v387 = vld [vmem:[#allocation2 + $0xb8] sm:$0xff]
        %v388 = vld [vmem:[#allocation2 + $0xc0] sm:$0xff]
        %v389 = vld [vmem:[#allocation2 + $0xc8] sm:$0xff]
        %v390 = vld [vmem:[#allocation2 + $0xd0] sm:$0xff]
        %v391 = vld [vmem:[#allocation2 + $0xd8] sm:$0xff]
        %v392 = vld [vmem:[#allocation2 + $0xe0] sm:$0xff]
        %v393 = vld [vmem:[#allocation2 + $0xe8] sm:$0xff]
        %v394 = vld [vmem:[#allocation2 + $0xf0] sm:$0xff]
        %v395 = vld [vmem:[#allocation2 + $0xf8] sm:$0xff]
        %v396 = vld [vmem:[#allocation2 + $0x100] sm:$0xff]
        %v397 = vld [vmem:[#allocation2 + $0x108] sm:$0xff]
        %v398 = vld [vmem:[#allocation2 + $0x110] sm:$0xff]
        %v399 = vld [vmem:[#allocation2 + $0x118] sm:$0xff]
        %v400 = vld [vmem:[#allocation2 + $0x120] sm:$0xff]
        %v401 = vld [vmem:[#allocation2 + $0x128] sm:$0xff]
        %v402 = vld [vmem:[#allocation2 + $0x130] sm:$0xff]
        %v403 = vld [vmem:[#allocation2 + $0x138] sm:$0xff]
        %v404 = vld [vmem:[#allocation2 + $0x140] sm:$0xff]
        %v405 = vld [vmem:[#allocation2 + $0x148] sm:$0xff]
        %v406 = vld [vmem:[#allocation2 + $0x150] sm:$0xff]
        %v407 = vld [vmem:[#allocation2 + $0x158] sm:$0xff]
        %v408 = vld [vmem:[#allocation2 + $0x160] sm:$0xff]
        %v409 = vld [vmem:[#allocation2 + $0x168] sm:$0xff]
        %v410 = vld [vmem:[#allocation2 + $0x170] sm:$0xff]
        %v411 = vld [vmem:[#allocation2 + $0x178] sm:$0xff]
        %v412 = vld [vmem:[#allocation2 + $0x180] sm:$0xff]
        %v413 = vld [vmem:[#allocation2 + $0x188] sm:$0xff]
        %v414 = vld [vmem:[#allocation2 + $0x190] sm:$0xff]
        %v415 = vld [vmem:[#allocation2 + $0x198] sm:$0xff]
        %v416 = vld [vmem:[#allocation2 + $0x1a0] sm:$0xff]
        %v417 = vld [vmem:[#allocation2 + $0x1a8] sm:$0xff]
        %v418 = vld [vmem:[#allocation2 + $0x1b0] sm:$0xff]
        %v419 = vld [vmem:[#allocation2 + $0x1b8] sm:$0xff]
        %v420 = vld [vmem:[#allocation2 + $0x1c0] sm:$0xff]
        %v421 = vld [vmem:[#allocation2 + $0x1c8] sm:$0xff]
        %v422 = vld [vmem:[#allocation2 + $0x1d0] sm:$0xff]
        %v423 = vld [vmem:[#allocation2 + $0x1d8] sm:$0xff]
        %v424 = vld [vmem:[#allocation2 + $0x1e0] sm:$0xff]
        %v425 = vld [vmem:[#allocation2 + $0x1e8] sm:$0xff]
        %v426 = vld [vmem:[#allocation2 + $0x1f0] sm:$0xff]
        %v427 = vld [vmem:[#allocation2 + $0x1f8] sm:$0xff]
        %v428 = vld [vmem:[#allocation2 + $0x200] sm:$0xff]
        %v429 = vld [vmem:[#allocation2 + $0x208] sm:$0xff]
        %v430 = vld [vmem:[#allocation2 + $0x210] sm:$0xff]
        %v431 = vld [vmem:[#allocation2 + $0x218] sm:$0xff]
        %v432 = vld [vmem:[#allocation2 + $0x220] sm:$0xff]
        %v433 = vld [vmem:[#allocation2 + $0x228] sm:$0xff]
        %v434 = vld [vmem:[#allocation2 + $0x230] sm:$0xff]
        %v435 = vld [vmem:[#allocation2 + $0x238] sm:$0xff]
        %v436 = vld [vmem:[#allocation2 + $0x240] sm:$0xff]
        %v437 = vld [vmem:[#allocation2 + $0x248] sm:$0xff]
        %v438 = vld [vmem:[#allocation2 + $0x250] sm:$0xff]
        %v439 = vld [vmem:[#allocation2 + $0x258] sm:$0xff]
        %v440 = vld [vmem:[#allocation2 + $0x260] sm:$0xff]
        %v441 = vld [vmem:[#allocation2 + $0x268] sm:$0xff]
        %v442 = vld [vmem:[#allocation2 + $0x270] sm:$0xff]
        %v443 = vld [vmem:[#allocation2 + $0x278] sm:$0xff]
        %v444 = vld [vmem:[#allocation2 + $0x280] sm:$0xff]
        %v445 = vld [vmem:[#allocation2 + $0x288] sm:$0xff]
        %v446 = vld [vmem:[#allocation2 + $0x290] sm:$0xff]
        %v447 = vld [vmem:[#allocation2 + $0x298] sm:$0xff]
        %v448 = vld [vmem:[#allocation2 + $0x2a0] sm:$0xff]
        %v449 = vld [vmem:[#allocation2 + $0x2a8] sm:$0xff]
        %v450 = vld [vmem:[#allocation2 + $0x2b0] sm:$0xff]
        %v451 = vld [vmem:[#allocation2 + $0x2b8] sm:$0xff]
        %v452 = vld [vmem:[#allocation2 + $0x2c0] sm:$0xff]
        %v453 = vld [vmem:[#allocation2 + $0x2c8] sm:$0xff]
        %v454 = vld [vmem:[#allocation2 + $0x2d0] sm:$0xff]
        %v455 = vld [vmem:[#allocation2 + $0x2d8] sm:$0xff]
        %v456 = vld [vmem:[#allocation2 + $0x2e0] sm:$0xff]
        %v457 = vld [vmem:[#allocation2 + $0x2e8] sm:$0xff]
        %v458 = vld [vmem:[#allocation2 + $0x2f0] sm:$0xff]
        %v459 = vld [vmem:[#allocation2 + $0x2f8] sm:$0xff]
        %v460 = vld [vmem:[#allocation2 + $0x300] sm:$0xff]
        %v461 = vld [vmem:[#allocation2 + $0x308] sm:$0xff]
        %v462 = vld [vmem:[#allocation2 + $0x310] sm:$0xff]
        %v463 = vld [vmem:[#allocation2 + $0x318] sm:$0xff]
        %v464 = vld [vmem:[#allocation2 + $0x320] sm:$0xff]
        %v465 = vld [vmem:[#allocation2 + $0x328] sm:$0xff]
        %v466 = vld [vmem:[#allocation2 + $0x330] sm:$0xff]
        %v467 = vld [vmem:[#allocation2 + $0x338] sm:$0xff]
        %v468 = vld [vmem:[#allocation2 + $0x340] sm:$0xff]
        %v469 = vld [vmem:[#allocation2 + $0x348] sm:$0xff]
        %v470 = vld [vmem:[#allocation2 + $0x350] sm:$0xff]
        %v471 = vld [vmem:[#allocation2 + $0x358] sm:$0xff]
        %v472 = vld [vmem:[#allocation2 + $0x360] sm:$0xff]
        %v473 = vld [vmem:[#allocation2 + $0x368] sm:$0xff]
        %v474 = vld [vmem:[#allocation2 + $0x370] sm:$0xff]
        %v475 = vld [vmem:[#allocation2 + $0x378] sm:$0xff]
        %v476 = vld [vmem:[#allocation2 + $0x380] sm:$0xff]
        %v477 = vld [vmem:[#allocation2 + $0x388] sm:$0xff]
        %v478 = vld [vmem:[#allocation2 + $0x390] sm:$0xff]
        %v479 = vld [vmem:[#allocation2 + $0x398] sm:$0xff]
        %v480 = vld [vmem:[#allocation2 + $0x3a0] sm:$0xff]
        %v481 = vld [vmem:[#allocation2 + $0x3a8] sm:$0xff]
        %v482 = vld [vmem:[#allocation2 + $0x3b0] sm:$0xff]
        %v483 = vld [vmem:[#allocation2 + $0x3b8] sm:$0xff]
        %v484 = vld [vmem:[#allocation2 + $0x3c0] sm:$0xff]
        %v485 = vld [vmem:[#allocation2 + $0x3c8] sm:$0xff]
        %v486 = vld [vmem:[#allocation2 + $0x3d0] sm:$0xff]
        %v487 = vld [vmem:[#allocation2 + $0x3d8] sm:$0xff]
        %v488 = vld [vmem:[#allocation2 + $0x3e0] sm:$0xff]
        %v489 = vld [vmem:[#allocation2 + $0x3e8] sm:$0xff]
        %v490 = vld [vmem:[#allocation2 + $0x3f0] sm:$0xff]
        %v491 = vld [vmem:[#allocation2 + $0x3f8] sm:$0xff]
        %v492 = vld [vmem:[%s196] sm:$0xff]
        %v493 = vld [vmem:[%s196 + $0x8] sm:$0xff]
        %v494 = vld [vmem:[%s196 + $0x10] sm:$0xff]
        %v495 = vld [vmem:[%s196 + $0x18] sm:$0xff]
        %v496 = vld [vmem:[%s196 + $0x20] sm:$0xff]
        %v497 = vld [vmem:[%s196 + $0x28] sm:$0xff]
        %v498 = vld [vmem:[%s196 + $0x30] sm:$0xff]
        %v499 = vld [vmem:[%s196 + $0x38] sm:$0xff]
        %v500 = vld [vmem:[%s196 + $0x40] sm:$0xff]
        %v501 = vld [vmem:[%s196 + $0x48] sm:$0xff]
        %v502 = vld [vmem:[%s196 + $0x50] sm:$0xff]
        %v503 = vld [vmem:[%s196 + $0x58] sm:$0xff]
        %v504 = vld [vmem:[%s196 + $0x60] sm:$0xff]
        %v505 = vld [vmem:[%s196 + $0x68] sm:$0xff]
        %v506 = vld [vmem:[%s196 + $0x70] sm:$0xff]
        %v507 = vld [vmem:[%s196 + $0x78] sm:$0xff]
        %v508 = vld [vmem:[%s196 + $0x80] sm:$0xff]
        %v509 = vld [vmem:[%s196 + $0x88] sm:$0xff]
        %v510 = vld [vmem:[%s196 + $0x90] sm:$0xff]
        %v511 = vld [vmem:[%s196 + $0x98] sm:$0xff]
        %v512 = vld [vmem:[%s196 + $0xa0] sm:$0xff]
        %v513 = vld [vmem:[%s196 + $0xa8] sm:$0xff]
        %v514 = vld [vmem:[%s196 + $0xb0] sm:$0xff]
        %v515 = vld [vmem:[%s196 + $0xb8] sm:$0xff]
        %v516 = vld [vmem:[%s196 + $0xc0] sm:$0xff]
        %v517 = vld [vmem:[%s196 + $0xc8] sm:$0xff]
        %v518 = vld [vmem:[%s196 + $0xd0] sm:$0xff]
        %v519 = vld [vmem:[%s196 + $0xd8] sm:$0xff]
        %v520 = vld [vmem:[%s196 + $0xe0] sm:$0xff]
        %v521 = vld [vmem:[%s196 + $0xe8] sm:$0xff]
        %v522 = vld [vmem:[%s196 + $0xf0] sm:$0xff]
        %v523 = vld [vmem:[%s196 + $0xf8] sm:$0xff]
        %v524 = vld [vmem:[%s196 + $0x100] sm:$0xff]
        %v525 = vld [vmem:[%s196 + $0x108] sm:$0xff]
        %v526 = vld [vmem:[%s196 + $0x110] sm:$0xff]
        %v527 = vld [vmem:[%s196 + $0x118] sm:$0xff]
        %v528 = vld [vmem:[%s196 + $0x120] sm:$0xff]
        %v529 = vld [vmem:[%s196 + $0x128] sm:$0xff]
        %v530 = vld [vmem:[%s196 + $0x130] sm:$0xff]
        %v531 = vld [vmem:[%s196 + $0x138] sm:$0xff]
        %v532 = vld [vmem:[%s196 + $0x140] sm:$0xff]
        %v533 = vld [vmem:[%s196 + $0x148] sm:$0xff]
        %v534 = vld [vmem:[%s196 + $0x150] sm:$0xff]
        %v535 = vld [vmem:[%s196 + $0x158] sm:$0xff]
        %v536 = vld [vmem:[%s196 + $0x160] sm:$0xff]
        %v537 = vld [vmem:[%s196 + $0x168] sm:$0xff]
        %v538 = vld [vmem:[%s196 + $0x170] sm:$0xff]
        %v539 = vld [vmem:[%s196 + $0x178] sm:$0xff]
        %v540 = vld [vmem:[%s196 + $0x180] sm:$0xff]
        %v541 = vld [vmem:[%s196 + $0x188] sm:$0xff]
        %v542 = vld [vmem:[%s196 + $0x190] sm:$0xff]
        %v543 = vld [vmem:[%s196 + $0x198] sm:$0xff]
        %v544 = vld [vmem:[%s196 + $0x1a0] sm:$0xff]
        %v545 = vld [vmem:[%s196 + $0x1a8] sm:$0xff]
        %v546 = vld [vmem:[%s196 + $0x1b0] sm:$0xff]
        %v547 = vld [vmem:[%s196 + $0x1b8] sm:$0xff]
        %v548 = vld [vmem:[%s196 + $0x1c0] sm:$0xff]
        %v549 = vld [vmem:[%s196 + $0x1c8] sm:$0xff]
        %v550 = vld [vmem:[%s196 + $0x1d0] sm:$0xff]
        %v551 = vld [vmem:[%s196 + $0x1d8] sm:$0xff]
        %v552 = vld [vmem:[%s196 + $0x1e0] sm:$0xff]
        %v553 = vld [vmem:[%s196 + $0x1e8] sm:$0xff]
        %v554 = vld [vmem:[%s196 + $0x1f0] sm:$0xff]
        %v555 = vld [vmem:[%s196 + $0x1f8] sm:$0xff]
        %v556 = vld [vmem:[%s196 + $0x200] sm:$0xff]
        %v557 = vld [vmem:[%s196 + $0x208] sm:$0xff]
        %v558 = vld [vmem:[%s196 + $0x210] sm:$0xff]
        %v559 = vld [vmem:[%s196 + $0x218] sm:$0xff]
        %v560 = vld [vmem:[%s196 + $0x220] sm:$0xff]
        %v561 = vld [vmem:[%s196 + $0x228] sm:$0xff]
        %v562 = vld [vmem:[%s196 + $0x230] sm:$0xff]
        %v563 = vld [vmem:[%s196 + $0x238] sm:$0xff]
        %v564 = vld [vmem:[%s196 + $0x240] sm:$0xff]
        %v565 = vld [vmem:[%s196 + $0x248] sm:$0xff]
        %v566 = vld [vmem:[%s196 + $0x250] sm:$0xff]
        %v567 = vld [vmem:[%s196 + $0x258] sm:$0xff]
        %v568 = vld [vmem:[%s196 + $0x260] sm:$0xff]
        %v569 = vld [vmem:[%s196 + $0x268] sm:$0xff]
        %v570 = vld [vmem:[%s196 + $0x270] sm:$0xff]
        %v571 = vld [vmem:[%s196 + $0x278] sm:$0xff]
        %v572 = vld [vmem:[%s196 + $0x280] sm:$0xff]
        %v573 = vld [vmem:[%s196 + $0x288] sm:$0xff]
        %v574 = vld [vmem:[%s196 + $0x290] sm:$0xff]
        %v575 = vld [vmem:[%s196 + $0x298] sm:$0xff]
        %v576 = vld [vmem:[%s196 + $0x2a0] sm:$0xff]
        %v577 = vld [vmem:[%s196 + $0x2a8] sm:$0xff]
        %v578 = vld [vmem:[%s196 + $0x2b0] sm:$0xff]
        %v579 = vld [vmem:[%s196 + $0x2b8] sm:$0xff]
        %v580 = vld [vmem:[%s196 + $0x2c0] sm:$0xff]
        %v581 = vld [vmem:[%s196 + $0x2c8] sm:$0xff]
        %v582 = vld [vmem:[%s196 + $0x2d0] sm:$0xff]
        %v583 = vld [vmem:[%s196 + $0x2d8] sm:$0xff]
        %v584 = vld [vmem:[%s196 + $0x2e0] sm:$0xff]
        %v585 = vld [vmem:[%s196 + $0x2e8] sm:$0xff]
        %v586 = vld [vmem:[%s196 + $0x2f0] sm:$0xff]
        %v587 = vld [vmem:[%s196 + $0x2f8] sm:$0xff]
        %v588 = vld [vmem:[%s196 + $0x300] sm:$0xff]
        %v589 = vld [vmem:[%s196 + $0x308] sm:$0xff]
        %v590 = vld [vmem:[%s196 + $0x310] sm:$0xff]
        %v591 = vld [vmem:[%s196 + $0x318] sm:$0xff]
        %v592 = vld [vmem:[%s196 + $0x320] sm:$0xff]
        %v593 = vld [vmem:[%s196 + $0x328] sm:$0xff]
        %v594 = vld [vmem:[%s196 + $0x330] sm:$0xff]
        %v595 = vld [vmem:[%s196 + $0x338] sm:$0xff]
        %v596 = vld [vmem:[%s196 + $0x340] sm:$0xff]
        %v597 = vld [vmem:[%s196 + $0x348] sm:$0xff]
        %v598 = vld [vmem:[%s196 + $0x350] sm:$0xff]
        %v599 = vld [vmem:[%s196 + $0x358] sm:$0xff]
        %v600 = vld [vmem:[%s196 + $0x360] sm:$0xff]
        %v601 = vld [vmem:[%s196 + $0x368] sm:$0xff]
        %v602 = vld [vmem:[%s196 + $0x370] sm:$0xff]
        %v603 = vld [vmem:[%s196 + $0x378] sm:$0xff]
        %v604 = vld [vmem:[%s196 + $0x380] sm:$0xff]
        %v605 = vld [vmem:[%s196 + $0x388] sm:$0xff]
        %v606 = vld [vmem:[%s196 + $0x390] sm:$0xff]
        %v607 = vld [vmem:[%s196 + $0x398] sm:$0xff]
        %v608 = vld [vmem:[%s196 + $0x3a0] sm:$0xff]
        %v609 = vld [vmem:[%s196 + $0x3a8] sm:$0xff]
        %v610 = vld [vmem:[%s196 + $0x3b0] sm:$0xff]
        %v611 = vld [vmem:[%s196 + $0x3b8] sm:$0xff]
        %v612 = vld [vmem:[%s196 + $0x3c0] sm:$0xff]
        %v613 = vld [vmem:[%s196 + $0x3c8] sm:$0xff]
        %v614 = vld [vmem:[%s196 + $0x3d0] sm:$0xff]
        %v615 = vld [vmem:[%s196 + $0x3d8] sm:$0xff]
        %v616 = vld [vmem:[%s196 + $0x3e0] sm:$0xff]
        %v617 = vld [vmem:[%s196 + $0x3e8] sm:$0xff]
        %v618 = vld [vmem:[%s196 + $0x3f0] sm:$0xff]
        %v619 = vld [vmem:[%s196 + $0x3f8] sm:$0xff]
        %v620 = vld [vmem:[%s205] sm:$0xff]
        %v621 = vld [vmem:[%s205 + $0x8] sm:$0xff]
        %v622 = vld [vmem:[%s205 + $0x10] sm:$0xff]
        %v623 = vld [vmem:[%s205 + $0x18] sm:$0xff]
        %v624 = vld [vmem:[%s205 + $0x20] sm:$0xff]
        %v625 = vld [vmem:[%s205 + $0x28] sm:$0xff]
        %v626 = vld [vmem:[%s205 + $0x30] sm:$0xff]
        %v627 = vld [vmem:[%s205 + $0x38] sm:$0xff]
        %v628 = vld [vmem:[%s205 + $0x40] sm:$0xff]
        %v629 = vld [vmem:[%s205 + $0x48] sm:$0xff]
        %v630 = vld [vmem:[%s205 + $0x50] sm:$0xff]
        %v631 = vld [vmem:[%s205 + $0x58] sm:$0xff]
        %v632 = vld [vmem:[%s205 + $0x60] sm:$0xff]
        %v633 = vld [vmem:[%s205 + $0x68] sm:$0xff]
        %v634 = vld [vmem:[%s205 + $0x70] sm:$0xff]
        %v635 = vld [vmem:[%s205 + $0x78] sm:$0xff]
        %v636 = vld [vmem:[%s205 + $0x80] sm:$0xff]
        %v637 = vld [vmem:[%s205 + $0x88] sm:$0xff]
        %v638 = vld [vmem:[%s205 + $0x90] sm:$0xff]
        %v639 = vld [vmem:[%s205 + $0x98] sm:$0xff]
        %v640 = vld [vmem:[%s205 + $0xa0] sm:$0xff]
        %v641 = vld [vmem:[%s205 + $0xa8] sm:$0xff]
        %v642 = vld [vmem:[%s205 + $0xb0] sm:$0xff]
        %v643 = vld [vmem:[%s205 + $0xb8] sm:$0xff]
        %v644 = vld [vmem:[%s205 + $0xc0] sm:$0xff]
        %v645 = vld [vmem:[%s205 + $0xc8] sm:$0xff]
        %v646 = vld [vmem:[%s205 + $0xd0] sm:$0xff]
        %v647 = vld [vmem:[%s205 + $0xd8] sm:$0xff]
        %v648 = vld [vmem:[%s205 + $0xe0] sm:$0xff]
        %v649 = vld [vmem:[%s205 + $0xe8] sm:$0xff]
        %v650 = vld [vmem:[%s205 + $0xf0] sm:$0xff]
        %v651 = vld [vmem:[%s205 + $0xf8] sm:$0xff]
        %v652 = vld [vmem:[%s205 + $0x100] sm:$0xff]
        %v653 = vld [vmem:[%s205 + $0x108] sm:$0xff]
        %v654 = vld [vmem:[%s205 + $0x110] sm:$0xff]
        %v655 = vld [vmem:[%s205 + $0x118] sm:$0xff]
        %v656 = vld [vmem:[%s205 + $0x120] sm:$0xff]
        %v657 = vld [vmem:[%s205 + $0x128] sm:$0xff]
        %v658 = vld [vmem:[%s205 + $0x130] sm:$0xff]
        %v659 = vld [vmem:[%s205 + $0x138] sm:$0xff]
        %v660 = vld [vmem:[%s205 + $0x140] sm:$0xff]
        %v661 = vld [vmem:[%s205 + $0x148] sm:$0xff]
        %v662 = vld [vmem:[%s205 + $0x150] sm:$0xff]
        %v663 = vld [vmem:[%s205 + $0x158] sm:$0xff]
        %v664 = vld [vmem:[%s205 + $0x160] sm:$0xff]
        %v665 = vld [vmem:[%s205 + $0x168] sm:$0xff]
        %v666 = vld [vmem:[%s205 + $0x170] sm:$0xff]
        %v667 = vld [vmem:[%s205 + $0x178] sm:$0xff]
        %v668 = vld [vmem:[%s205 + $0x180] sm:$0xff]
        %v669 = vld [vmem:[%s205 + $0x188] sm:$0xff]
        %v670 = vld [vmem:[%s205 + $0x190] sm:$0xff]
        %v671 = vld [vmem:[%s205 + $0x198] sm:$0xff]
        %v672 = vld [vmem:[%s205 + $0x1a0] sm:$0xff]
        %v673 = vld [vmem:[%s205 + $0x1a8] sm:$0xff]
        %v674 = vld [vmem:[%s205 + $0x1b0] sm:$0xff]
        %v675 = vld [vmem:[%s205 + $0x1b8] sm:$0xff]
        %v676 = vld [vmem:[%s205 + $0x1c0] sm:$0xff]
        %v677 = vld [vmem:[%s205 + $0x1c8] sm:$0xff]
        %v678 = vld [vmem:[%s205 + $0x1d0] sm:$0xff]
        %v679 = vld [vmem:[%s205 + $0x1d8] sm:$0xff]
        %v680 = vld [vmem:[%s205 + $0x1e0] sm:$0xff]
        %v681 = vld [vmem:[%s205 + $0x1e8] sm:$0xff]
        %v682 = vld [vmem:[%s205 + $0x1f0] sm:$0xff]
        %v683 = vld [vmem:[%s205 + $0x1f8] sm:$0xff]
        %v684 = vld [vmem:[%s205 + $0x200] sm:$0xff]
        %v685 = vld [vmem:[%s205 + $0x208] sm:$0xff]
        %v686 = vld [vmem:[%s205 + $0x210] sm:$0xff]
        %v687 = vld [vmem:[%s205 + $0x218] sm:$0xff]
        %v688 = vld [vmem:[%s205 + $0x220] sm:$0xff]
        %v689 = vld [vmem:[%s205 + $0x228] sm:$0xff]
        %v690 = vld [vmem:[%s205 + $0x230] sm:$0xff]
        %v691 = vld [vmem:[%s205 + $0x238] sm:$0xff]
        %v692 = vld [vmem:[%s205 + $0x240] sm:$0xff]
        %v693 = vld [vmem:[%s205 + $0x248] sm:$0xff]
        %v694 = vld [vmem:[%s205 + $0x250] sm:$0xff]
        %v695 = vld [vmem:[%s205 + $0x258] sm:$0xff]
        %v696 = vld [vmem:[%s205 + $0x260] sm:$0xff]
        %v697 = vld [vmem:[%s205 + $0x268] sm:$0xff]
        %v698 = vld [vmem:[%s205 + $0x270] sm:$0xff]
        %v699 = vld [vmem:[%s205 + $0x278] sm:$0xff]
        %v700 = vld [vmem:[%s205 + $0x280] sm:$0xff]
        %v701 = vld [vmem:[%s205 + $0x288] sm:$0xff]
        %v702 = vld [vmem:[%s205 + $0x290] sm:$0xff]
        %v703 = vld [vmem:[%s205 + $0x298] sm:$0xff]
        %v704 = vld [vmem:[%s205 + $0x2a0] sm:$0xff]
        %v705 = vld [vmem:[%s205 + $0x2a8] sm:$0xff]
        %v706 = vld [vmem:[%s205 + $0x2b0] sm:$0xff]
        %v707 = vld [vmem:[%s205 + $0x2b8] sm:$0xff]
        %v708 = vld [vmem:[%s205 + $0x2c0] sm:$0xff]
        %v709 = vld [vmem:[%s205 + $0x2c8] sm:$0xff]
        %v710 = vld [vmem:[%s205 + $0x2d0] sm:$0xff]
        %v711 = vld [vmem:[%s205 + $0x2d8] sm:$0xff]
        %v712 = vld [vmem:[%s205 + $0x2e0] sm:$0xff]
        %v713 = vld [vmem:[%s205 + $0x2e8] sm:$0xff]
        %v714 = vld [vmem:[%s205 + $0x2f0] sm:$0xff]
        %v715 = vld [vmem:[%s205 + $0x2f8] sm:$0xff]
        %v716 = vld [vmem:[%s205 + $0x300] sm:$0xff]
        %v717 = vld [vmem:[%s205 + $0x308] sm:$0xff]
        %v718 = vld [vmem:[%s205 + $0x310] sm:$0xff]
        %v719 = vld [vmem:[%s205 + $0x318] sm:$0xff]
        %v720 = vld [vmem:[%s205 + $0x320] sm:$0xff]
        %v721 = vld [vmem:[%s205 + $0x328] sm:$0xff]
        %v722 = vld [vmem:[%s205 + $0x330] sm:$0xff]
        %v723 = vld [vmem:[%s205 + $0x338] sm:$0xff]
        %v724 = vld [vmem:[%s205 + $0x340] sm:$0xff]
        %v725 = vld [vmem:[%s205 + $0x348] sm:$0xff]
        %v726 = vld [vmem:[%s205 + $0x350] sm:$0xff]
        %v727 = vld [vmem:[%s205 + $0x358] sm:$0xff]
        %v728 = vld [vmem:[%s205 + $0x360] sm:$0xff]
        %v729 = vld [vmem:[%s205 + $0x368] sm:$0xff]
        %v730 = vld [vmem:[%s205 + $0x370] sm:$0xff]
        %v731 = vld [vmem:[%s205 + $0x378] sm:$0xff]
        %v732 = vld [vmem:[%s205 + $0x380] sm:$0xff]
        %v733 = vld [vmem:[%s205 + $0x388] sm:$0xff]
        %v734 = vld [vmem:[%s205 + $0x390] sm:$0xff]
        %v735 = vld [vmem:[%s205 + $0x398] sm:$0xff]
        %v736 = vld [vmem:[%s205 + $0x3a0] sm:$0xff]
        %v737 = vld [vmem:[%s205 + $0x3a8] sm:$0xff]
        %v738 = vld [vmem:[%s205 + $0x3b0] sm:$0xff]
        %v739 = vld [vmem:[%s205 + $0x3b8] sm:$0xff]
        %v740 = vld [vmem:[%s205 + $0x3c0] sm:$0xff]
        %v741 = vld [vmem:[%s205 + $0x3c8] sm:$0xff]
        %v742 = vld [vmem:[%s205 + $0x3d0] sm:$0xff]
        %v743 = vld [vmem:[%s205 + $0x3d8] sm:$0xff]
        %v744 = vld [vmem:[%s205 + $0x3e0] sm:$0xff]
        %v745 = vld [vmem:[%s205 + $0x3e8] sm:$0xff]
        %v746 = vld [vmem:[%s205 + $0x3f0] sm:$0xff]
        %v747 = vld [vmem:[%s205 + $0x3f8] sm:$0xff]
        %v748 = vld [vmem:[%s205 + $0x400] sm:$0xff]
        %v749 = vld [vmem:[%s205 + $0x408] sm:$0xff]
        %v750 = vld [vmem:[%s205 + $0x410] sm:$0xff]
        %v751 = vld [vmem:[%s205 + $0x418] sm:$0xff]
        %v752 = vld [vmem:[%s205 + $0x420] sm:$0xff]
        %v753 = vld [vmem:[%s205 + $0x428] sm:$0xff]
        %v754 = vld [vmem:[%s205 + $0x430] sm:$0xff]
        %v755 = vld [vmem:[%s205 + $0x438] sm:$0xff]
        %v756 = vld [vmem:[%s205 + $0x440] sm:$0xff]
        %v757 = vld [vmem:[%s205 + $0x448] sm:$0xff]
        %v758 = vld [vmem:[%s205 + $0x450] sm:$0xff]
        %v759 = vld [vmem:[%s205 + $0x458] sm:$0xff]
        %v760 = vld [vmem:[%s205 + $0x460] sm:$0xff]
        %v761 = vld [vmem:[%s205 + $0x468] sm:$0xff]
        %v762 = vld [vmem:[%s205 + $0x470] sm:$0xff]
        %v763 = vld [vmem:[%s205 + $0x478] sm:$0xff]
        %v764 = vld [vmem:[%s205 + $0x480] sm:$0xff]
        %v765 = vld [vmem:[%s205 + $0x488] sm:$0xff]
        %v766 = vld [vmem:[%s205 + $0x490] sm:$0xff]
        %v767 = vld [vmem:[%s205 + $0x498] sm:$0xff]
        %v768 = vld [vmem:[%s205 + $0x4a0] sm:$0xff]
        %v769 = vld [vmem:[%s205 + $0x4a8] sm:$0xff]
        %v770 = vld [vmem:[%s205 + $0x4b0] sm:$0xff]
        %v771 = vld [vmem:[%s205 + $0x4b8] sm:$0xff]
        %v772 = vld [vmem:[%s205 + $0x4c0] sm:$0xff]
        %v773 = vld [vmem:[%s205 + $0x4c8] sm:$0xff]
        %v774 = vld [vmem:[%s205 + $0x4d0] sm:$0xff]
        %v775 = vld [vmem:[%s205 + $0x4d8] sm:$0xff]
        %v776 = vld [vmem:[%s205 + $0x4e0] sm:$0xff]
        %v777 = vld [vmem:[%s205 + $0x4e8] sm:$0xff]
        %v778 = vld [vmem:[%s205 + $0x4f0] sm:$0xff]
        %v779 = vld [vmem:[%s205 + $0x4f8] sm:$0xff]
        %v780 = vld [vmem:[%s205 + $0x500] sm:$0xff]
        %v781 = vld [vmem:[%s205 + $0x508] sm:$0xff]
        %v782 = vld [vmem:[%s205 + $0x510] sm:$0xff]
        %v783 = vld [vmem:[%s205 + $0x518] sm:$0xff]
        %v784 = vld [vmem:[%s205 + $0x520] sm:$0xff]
        %v785 = vld [vmem:[%s205 + $0x528] sm:$0xff]
        %v786 = vld [vmem:[%s205 + $0x530] sm:$0xff]
        %v787 = vld [vmem:[%s205 + $0x538] sm:$0xff]
        %v788 = vld [vmem:[%s205 + $0x540] sm:$0xff]
        %v789 = vld [vmem:[%s205 + $0x548] sm:$0xff]
        %v790 = vld [vmem:[%s205 + $0x550] sm:$0xff]
        %v791 = vld [vmem:[%s205 + $0x558] sm:$0xff]
        %v792 = vld [vmem:[%s205 + $0x560] sm:$0xff]
        %v793 = vld [vmem:[%s205 + $0x568] sm:$0xff]
        %v794 = vld [vmem:[%s205 + $0x570] sm:$0xff]
        %v795 = vld [vmem:[%s205 + $0x578] sm:$0xff]
        %v796 = vld [vmem:[%s205 + $0x580] sm:$0xff]
        %v797 = vld [vmem:[%s205 + $0x588] sm:$0xff]
        %v798 = vld [vmem:[%s205 + $0x590] sm:$0xff]
        %v799 = vld [vmem:[%s205 + $0x598] sm:$0xff]
        %v800 = vld [vmem:[%s205 + $0x5a0] sm:$0xff]
        %v801 = vld [vmem:[%s205 + $0x5a8] sm:$0xff]
        %v802 = vld [vmem:[%s205 + $0x5b0] sm:$0xff]
        %v803 = vld [vmem:[%s205 + $0x5b8] sm:$0xff]
        %v804 = vld [vmem:[%s205 + $0x5c0] sm:$0xff]
        %v805 = vld [vmem:[%s205 + $0x5c8] sm:$0xff]
        %v806 = vld [vmem:[%s205 + $0x5d0] sm:$0xff]
        %v807 = vld [vmem:[%s205 + $0x5d8] sm:$0xff]
        %v808 = vld [vmem:[%s205 + $0x5e0] sm:$0xff]
        %v809 = vld [vmem:[%s205 + $0x5e8] sm:$0xff]
        %v810 = vld [vmem:[%s205 + $0x5f0] sm:$0xff]
        %v811 = vld [vmem:[%s205 + $0x5f8] sm:$0xff]
        %v812 = vld [vmem:[%s205 + $0x600] sm:$0xff]
        %v813 = vld [vmem:[%s205 + $0x608] sm:$0xff]
        %v814 = vld [vmem:[%s205 + $0x610] sm:$0xff]
        %v815 = vld [vmem:[%s205 + $0x618] sm:$0xff]
        %v816 = vld [vmem:[%s205 + $0x620] sm:$0xff]
        %v817 = vld [vmem:[%s205 + $0x628] sm:$0xff]
        %v818 = vld [vmem:[%s205 + $0x630] sm:$0xff]
        %v819 = vld [vmem:[%s205 + $0x638] sm:$0xff]
        %v820 = vld [vmem:[%s205 + $0x640] sm:$0xff]
        %v821 = vld [vmem:[%s205 + $0x648] sm:$0xff]
        %v822 = vld [vmem:[%s205 + $0x650] sm:$0xff]
        %v823 = vld [vmem:[%s205 + $0x658] sm:$0xff]
        %v824 = vld [vmem:[%s205 + $0x660] sm:$0xff]
        %v825 = vld [vmem:[%s205 + $0x668] sm:$0xff]
        %v826 = vld [vmem:[%s205 + $0x670] sm:$0xff]
        %v827 = vld [vmem:[%s205 + $0x678] sm:$0xff]
        %v828 = vld [vmem:[%s205 + $0x680] sm:$0xff]
        %v829 = vld [vmem:[%s205 + $0x688] sm:$0xff]
        %v830 = vld [vmem:[%s205 + $0x690] sm:$0xff]
        %v831 = vld [vmem:[%s205 + $0x698] sm:$0xff]
        %v832 = vld [vmem:[%s205 + $0x6a0] sm:$0xff]
        %v833 = vld [vmem:[%s205 + $0x6a8] sm:$0xff]
        %v834 = vld [vmem:[%s205 + $0x6b0] sm:$0xff]
        %v835 = vld [vmem:[%s205 + $0x6b8] sm:$0xff]
        %v836 = vld [vmem:[%s205 + $0x6c0] sm:$0xff]
        %v837 = vld [vmem:[%s205 + $0x6c8] sm:$0xff]
        %v838 = vld [vmem:[%s205 + $0x6d0] sm:$0xff]
        %v839 = vld [vmem:[%s205 + $0x6d8] sm:$0xff]
        %v840 = vld [vmem:[%s205 + $0x6e0] sm:$0xff]
        %v841 = vld [vmem:[%s205 + $0x6e8] sm:$0xff]
        %v842 = vld [vmem:[%s205 + $0x6f0] sm:$0xff]
        %v843 = vld [vmem:[%s205 + $0x6f8] sm:$0xff]
        %v844 = vld [vmem:[%s205 + $0x700] sm:$0xff]
        %v845 = vld [vmem:[%s205 + $0x708] sm:$0xff]
        %v846 = vld [vmem:[%s205 + $0x710] sm:$0xff]
        %v847 = vld [vmem:[%s205 + $0x718] sm:$0xff]
        %v848 = vld [vmem:[%s205 + $0x720] sm:$0xff]
        %v849 = vld [vmem:[%s205 + $0x728] sm:$0xff]
        %v850 = vld [vmem:[%s205 + $0x730] sm:$0xff]
        %v851 = vld [vmem:[%s205 + $0x738] sm:$0xff]
        %v852 = vld [vmem:[%s205 + $0x740] sm:$0xff]
        %v853 = vld [vmem:[%s205 + $0x748] sm:$0xff]
        %v854 = vld [vmem:[%s205 + $0x750] sm:$0xff]
        %v855 = vld [vmem:[%s205 + $0x758] sm:$0xff]
        %v856 = vld [vmem:[%s205 + $0x760] sm:$0xff]
        %v857 = vld [vmem:[%s205 + $0x768] sm:$0xff]
        %v858 = vld [vmem:[%s205 + $0x770] sm:$0xff]
        %v859 = vld [vmem:[%s205 + $0x778] sm:$0xff]
        %v860 = vld [vmem:[%s205 + $0x780] sm:$0xff]
        %v861 = vld [vmem:[%s205 + $0x788] sm:$0xff]
        %v862 = vld [vmem:[%s205 + $0x790] sm:$0xff]
        %v863 = vld [vmem:[%s205 + $0x798] sm:$0xff]
        %v864 = vld [vmem:[%s205 + $0x7a0] sm:$0xff]
        %v865 = vld [vmem:[%s205 + $0x7a8] sm:$0xff]
        %v866 = vld [vmem:[%s205 + $0x7b0] sm:$0xff]
        %v867 = vld [vmem:[%s205 + $0x7b8] sm:$0xff]
        %v868 = vld [vmem:[%s205 + $0x7c0] sm:$0xff]
        %v869 = vld [vmem:[%s205 + $0x7c8] sm:$0xff]
        %v870 = vld [vmem:[%s205 + $0x7d0] sm:$0xff]
        %v871 = vld [vmem:[%s205 + $0x7d8] sm:$0xff]
        %v872 = vld [vmem:[%s205 + $0x7e0] sm:$0xff]
        %v873 = vld [vmem:[%s205 + $0x7e8] sm:$0xff]
        %v874 = vld [vmem:[%s205 + $0x7f0] sm:$0xff]
        %v875 = vld [vmem:[%s205 + $0x7f8] sm:$0xff]
        %876 = vmatprep.subr.mxu0 %v681
        %877 = vmatpush1.msra.mxu0 %v680
        %878 = vmatprep.subr.mxu0 %v677
        %879 = vmatpush1.msra.mxu0 %v676
        %880 = vmatprep.subr.mxu0 %v673
        %881 = vmatpush1.msra.mxu0 %v672
        %882 = vmatprep.subr.mxu0 %v669
        %883 = vmatpush1.msra.mxu0 %v668
        %884 = vmatprep.subr.mxu0 %v665
        %885 = vmatpush1.msra.mxu0 %v664
        %886 = vmatprep.subr.mxu0 %v661
        %887 = vmatpush1.msra.mxu0 %v660
        %888 = vmatprep.subr.mxu0 %v657
        %889 = vmatpush1.msra.mxu0 %v656
        %890 = vmatprep.subr.mxu0 %v653
        %891 = vmatpush1.msra.mxu0 %v652
        %892 = vmatprep.subr.mxu0 %v649
        %893 = vmatpush1.msra.mxu0 %v648
        %894 = vmatprep.subr.mxu0 %v645
        %895 = vmatpush1.msra.mxu0 %v644
        %896 = vmatprep.subr.mxu0 %v641
        %897 = vmatpush1.msra.mxu0 %v640
        %898 = vmatprep.subr.mxu0 %v637
        %899 = vmatpush1.msra.mxu0 %v636
        %900 = vmatprep.subr.mxu0 %v633
        %901 = vmatpush1.msra.mxu0 %v632
        %902 = vmatprep.subr.mxu0 %v629
        %903 = vmatpush1.msra.mxu0 %v628
        %904 = vmatprep.subr.mxu0 %v625
        %905 = vmatpush1.msra.mxu0 %v624
        %906 = vmatprep.subr.mxu0 %v621
        %907 = vmatpush1.msra.mxu0 %v620
        %908 = vmatprep.subr.mxu0 %v745
        %909 = vmatpush2.msra.mxu0 %v744
        %910 = vmatprep.subr.mxu0 %v741
        %911 = vmatpush2.msra.mxu0 %v740
        %912 = vmatprep.subr.mxu0 %v737
        %913 = vmatpush2.msra.mxu0 %v736
        %914 = vmatprep.subr.mxu0 %v733
        %915 = vmatpush2.msra.mxu0 %v732
        %916 = vmatprep.subr.mxu0 %v729
        %917 = vmatpush2.msra.mxu0 %v728
        %918 = vmatprep.subr.mxu0 %v725
        %919 = vmatpush2.msra.mxu0 %v724
        %920 = vmatprep.subr.mxu0 %v721
        %921 = vmatpush2.msra.mxu0 %v720
        %922 = vmatprep.subr.mxu0 %v717
        %923 = vmatpush2.msra.mxu0 %v716
        %924 = vmatprep.subr.mxu0 %v713
        %925 = vmatpush2.msra.mxu0 %v712
        %926 = vmatprep.subr.mxu0 %v709
        %927 = vmatpush2.msra.mxu0 %v708
        %928 = vmatprep.subr.mxu0 %v705
        %929 = vmatpush2.msra.mxu0 %v704
        %930 = vmatprep.subr.mxu0 %v701
        %931 = vmatpush2.msra.mxu0 %v700
        %932 = vmatprep.subr.mxu0 %v697
        %933 = vmatpush2.msra.mxu0 %v696
        %934 = vmatprep.subr.mxu0 %v693
        %935 = vmatpush2.msra.mxu0 %v692
        %936 = vmatprep.subr.mxu0 %v689
        %937 = vmatpush2.msra.mxu0 %v688
        %938 = vmatprep.subr.mxu0 %v685
        %939 = vmatpush2.msra.mxu0 %v684
        %940 = vmatprep.mubr.f32.mxu0 %v493
        %941 = vmatmul.mubr.f32.gmra.mxu0 %v492
        %v942 = vpop.f32.mrf.mxu0
        %v943 = vadd.f32 0.0, %v942
        %v944 = vpop.f32.mrf.mxu0
        %v945 = vadd.f32 0.0, %v944
        %946 = vmatprep.mubr.f32.mxu0 %v497
        %947 = vmatmul.mubr.f32.gmra.mxu0 %v496
        %v948 = vpop.f32.mrf.mxu0
        %v949 = vadd.f32 0.0, %v948
        %v950 = vpop.f32.mrf.mxu0
        %v951 = vadd.f32 0.0, %v950
        %952 = vmatprep.mubr.f32.mxu0 %v501
        %953 = vmatmul.mubr.f32.gmra.mxu0 %v500
        %v954 = vpop.f32.mrf.mxu0
        %v955 = vadd.f32 0.0, %v954
        %v956 = vpop.f32.mrf.mxu0
        %v957 = vadd.f32 0.0, %v956
        %958 = vmatprep.mubr.f32.mxu0 %v505
        %959 = vmatmul.mubr.f32.gmra.mxu0 %v504
        %v960 = vpop.f32.mrf.mxu0
        %v961 = vadd.f32 0.0, %v960
        %v962 = vpop.f32.mrf.mxu0
        %v963 = vadd.f32 0.0, %v962
        %964 = vmatprep.mubr.f32.mxu0 %v509
        %965 = vmatmul.mubr.f32.gmra.mxu0 %v508
        %v966 = vpop.f32.mrf.mxu0
        %v967 = vadd.f32 0.0, %v966
        %v968 = vpop.f32.mrf.mxu0
        %v969 = vadd.f32 0.0, %v968
        %970 = vmatprep.mubr.f32.mxu0 %v513
        %971 = vmatmul.mubr.f32.gmra.mxu0 %v512
        %v972 = vpop.f32.mrf.mxu0
        %v973 = vadd.f32 0.0, %v972
        %v974 = vpop.f32.mrf.mxu0
        %v975 = vadd.f32 0.0, %v974
        %976 = vmatprep.mubr.f32.mxu0 %v517
        %977 = vmatmul.mubr.f32.gmra.mxu0 %v516
        %v978 = vpop.f32.mrf.mxu0
        %v979 = vadd.f32 0.0, %v978
        %v980 = vpop.f32.mrf.mxu0
        %v981 = vadd.f32 0.0, %v980
        %982 = vmatprep.mubr.f32.mxu0 %v521
        %983 = vmatmul.mubr.f32.gmra.mxu0 %v520
        %v984 = vpop.f32.mrf.mxu0
        %v985 = vadd.f32 0.0, %v984
        %v986 = vpop.f32.mrf.mxu0
        %v987 = vadd.f32 0.0, %v986
        %988 = vmatprep.mubr.f32.mxu0 %v525
        %989 = vmatmul.mubr.f32.gmra.mxu0 %v524
        %v990 = vpop.f32.mrf.mxu0
        %v991 = vadd.f32 0.0, %v990
        %v992 = vpop.f32.mrf.mxu0
        %v993 = vadd.f32 0.0, %v992
        %994 = vmatprep.mubr.f32.mxu0 %v529
        %995 = vmatmul.mubr.f32.gmra.mxu0 %v528
        %v996 = vpop.f32.mrf.mxu0
        %v997 = vadd.f32 0.0, %v996
        %v998 = vpop.f32.mrf.mxu0
        %v999 = vadd.f32 0.0, %v998
        %1000 = vmatprep.mubr.f32.mxu0 %v533
        %1001 = vmatmul.mubr.f32.gmra.mxu0 %v532
        %v1002 = vpop.f32.mrf.mxu0
        %v1003 = vadd.f32 0.0, %v1002
        %v1004 = vpop.f32.mrf.mxu0
        %v1005 = vadd.f32 0.0, %v1004
        %1006 = vmatprep.mubr.f32.mxu0 %v537
        %1007 = vmatmul.mubr.f32.gmra.mxu0 %v536
        %v1008 = vpop.f32.mrf.mxu0
        %v1009 = vadd.f32 0.0, %v1008
        %v1010 = vpop.f32.mrf.mxu0
        %v1011 = vadd.f32 0.0, %v1010
        %1012 = vmatprep.mubr.f32.mxu0 %v541
        %1013 = vmatmul.mubr.f32.gmra.mxu0 %v540
        %v1014 = vpop.f32.mrf.mxu0
        %v1015 = vadd.f32 0.0, %v1014
        %v1016 = vpop.f32.mrf.mxu0
        %v1017 = vadd.f32 0.0, %v1016
        %1018 = vmatprep.mubr.f32.mxu0 %v545
        %1019 = vmatmul.mubr.f32.gmra.mxu0 %v544
        %v1020 = vpop.f32.mrf.mxu0
        %v1021 = vadd.f32 0.0, %v1020
        %v1022 = vpop.f32.mrf.mxu0
        %v1023 = vadd.f32 0.0, %v1022
        %1024 = vmatprep.mubr.f32.mxu0 %v549
        %1025 = vmatmul.mubr.f32.gmra.mxu0 %v548
        %v1026 = vpop.f32.mrf.mxu0
        %v1027 = vadd.f32 0.0, %v1026
        %v1028 = vpop.f32.mrf.mxu0
        %v1029 = vadd.f32 0.0, %v1028
        %1030 = vmatprep.mubr.f32.mxu0 %v553
        %1031 = vmatmul.mubr.f32.gmra.mxu0 %v552
        %v1032 = vpop.f32.mrf.mxu0
        %v1033 = vadd.f32 0.0, %v1032
        %v1034 = vpop.f32.mrf.mxu0
        %v1035 = vadd.f32 0.0, %v1034
        %1036 = vmatprep.mubr.f32.mxu0 %v557
        %1037 = vmatmul.mubr.f32.gmra.mxu0 %v556
        %v1038 = vpop.f32.mrf.mxu0
        %v1039 = vadd.f32 0.0, %v1038
        %v1040 = vpop.f32.mrf.mxu0
        %v1041 = vadd.f32 0.0, %v1040
        %1042 = vmatprep.mubr.f32.mxu0 %v561
        %1043 = vmatmul.mubr.f32.gmra.mxu0 %v560
        %v1044 = vpop.f32.mrf.mxu0
        %v1045 = vadd.f32 0.0, %v1044
        %v1046 = vpop.f32.mrf.mxu0
        %v1047 = vadd.f32 0.0, %v1046
        %1048 = vmatprep.mubr.f32.mxu0 %v565
        %1049 = vmatmul.mubr.f32.gmra.mxu0 %v564
        %v1050 = vpop.f32.mrf.mxu0
        %v1051 = vadd.f32 0.0, %v1050
        %v1052 = vpop.f32.mrf.mxu0
        %v1053 = vadd.f32 0.0, %v1052
        %1054 = vmatprep.mubr.f32.mxu0 %v569
        %1055 = vmatmul.mubr.f32.gmra.mxu0 %v568
        %v1056 = vpop.f32.mrf.mxu0
        %v1057 = vadd.f32 0.0, %v1056
        %v1058 = vpop.f32.mrf.mxu0
        %v1059 = vadd.f32 0.0, %v1058
        %1060 = vmatprep.mubr.f32.mxu0 %v573
        %1061 = vmatmul.mubr.f32.gmra.mxu0 %v572
        %v1062 = vpop.f32.mrf.mxu0
        %v1063 = vadd.f32 0.0, %v1062
        %v1064 = vpop.f32.mrf.mxu0
        %v1065 = vadd.f32 0.0, %v1064
        %1066 = vmatprep.mubr.f32.mxu0 %v577
        %1067 = vmatmul.mubr.f32.gmra.mxu0 %v576
        %v1068 = vpop.f32.mrf.mxu0
        %v1069 = vadd.f32 0.0, %v1068
        %v1070 = vpop.f32.mrf.mxu0
        %v1071 = vadd.f32 0.0, %v1070
        %1072 = vmatprep.mubr.f32.mxu0 %v581
        %1073 = vmatmul.mubr.f32.gmra.mxu0 %v580
        %v1074 = vpop.f32.mrf.mxu0
        %v1075 = vadd.f32 0.0, %v1074
        %v1076 = vpop.f32.mrf.mxu0
        %v1077 = vadd.f32 0.0, %v1076
        %1078 = vmatprep.mubr.f32.mxu0 %v585
        %1079 = vmatmul.mubr.f32.gmra.mxu0 %v584
        %v1080 = vpop.f32.mrf.mxu0
        %v1081 = vadd.f32 0.0, %v1080
        %v1082 = vpop.f32.mrf.mxu0
        %v1083 = vadd.f32 0.0, %v1082
        %1084 = vmatprep.mubr.f32.mxu0 %v589
        %1085 = vmatmul.mubr.f32.gmra.mxu0 %v588
        %v1086 = vpop.f32.mrf.mxu0
        %v1087 = vadd.f32 0.0, %v1086
        %v1088 = vpop.f32.mrf.mxu0
        %v1089 = vadd.f32 0.0, %v1088
        %1090 = vmatprep.mubr.f32.mxu0 %v593
        %1091 = vmatmul.mubr.f32.gmra.mxu0 %v592
        %v1092 = vpop.f32.mrf.mxu0
        %v1093 = vadd.f32 0.0, %v1092
        %v1094 = vpop.f32.mrf.mxu0
        %v1095 = vadd.f32 0.0, %v1094
        %1096 = vmatprep.mubr.f32.mxu0 %v597
        %1097 = vmatmul.mubr.f32.gmra.mxu0 %v596
        %v1098 = vpop.f32.mrf.mxu0
        %v1099 = vadd.f32 0.0, %v1098
        %v1100 = vpop.f32.mrf.mxu0
        %v1101 = vadd.f32 0.0, %v1100
        %1102 = vmatprep.mubr.f32.mxu0 %v601
        %1103 = vmatmul.mubr.f32.gmra.mxu0 %v600
        %v1104 = vpop.f32.mrf.mxu0
        %v1105 = vadd.f32 0.0, %v1104
        %v1106 = vpop.f32.mrf.mxu0
        %v1107 = vadd.f32 0.0, %v1106
        %1108 = vmatprep.mubr.f32.mxu0 %v605
        %1109 = vmatmul.mubr.f32.gmra.mxu0 %v604
        %v1110 = vpop.f32.mrf.mxu0
        %v1111 = vadd.f32 0.0, %v1110
        %v1112 = vpop.f32.mrf.mxu0
        %v1113 = vadd.f32 0.0, %v1112
        %1114 = vmatprep.mubr.f32.mxu0 %v609
        %1115 = vmatmul.mubr.f32.gmra.mxu0 %v608
        %v1116 = vpop.f32.mrf.mxu0
        %v1117 = vadd.f32 0.0, %v1116
        %v1118 = vpop.f32.mrf.mxu0
        %v1119 = vadd.f32 0.0, %v1118
        %1120 = vmatprep.mubr.f32.mxu0 %v613
        %1121 = vmatmul.mubr.f32.gmra.mxu0 %v612
        %v1122 = vpop.f32.mrf.mxu0
        %v1123 = vadd.f32 0.0, %v1122
        %v1124 = vpop.f32.mrf.mxu0
        %v1125 = vadd.f32 0.0, %v1124
        %1126 = vmatprep.mubr.f32.mxu0 %v617
        %1127 = vmatmul.mubr.f32.gmra.mxu0 %v616
        %v1128 = vpop.f32.mrf.mxu0
        %v1129 = vadd.f32 0.0, %v1128
        %v1130 = vpop.f32.mrf.mxu0
        %v1131 = vadd.f32 0.0, %v1130
        %1132 = vdwg.mxu0
        %1133 = vmatprep.subr.mxu0 %v809
        %1134 = vmatpush1.msra.mxu0 %v808
        %1135 = vmatprep.subr.mxu0 %v805
        %1136 = vmatpush1.msra.mxu0 %v804
        %1137 = vmatprep.subr.mxu0 %v801
        %1138 = vmatpush1.msra.mxu0 %v800
        %1139 = vmatprep.subr.mxu0 %v797
        %1140 = vmatpush1.msra.mxu0 %v796
        %1141 = vmatprep.subr.mxu0 %v793
        %1142 = vmatpush1.msra.mxu0 %v792
        %1143 = vmatprep.subr.mxu0 %v789
        %1144 = vmatpush1.msra.mxu0 %v788
        %1145 = vmatprep.subr.mxu0 %v785
        %1146 = vmatpush1.msra.mxu0 %v784
        %1147 = vmatprep.subr.mxu0 %v781
        %1148 = vmatpush1.msra.mxu0 %v780
        %1149 = vmatprep.subr.mxu0 %v777
        %1150 = vmatpush1.msra.mxu0 %v776
        %1151 = vmatprep.subr.mxu0 %v773
        %1152 = vmatpush1.msra.mxu0 %v772
        %1153 = vmatprep.subr.mxu0 %v769
        %1154 = vmatpush1.msra.mxu0 %v768
        %1155 = vmatprep.subr.mxu0 %v765
        %1156 = vmatpush1.msra.mxu0 %v764
        %1157 = vmatprep.subr.mxu0 %v761
        %1158 = vmatpush1.msra.mxu0 %v760
        %1159 = vmatprep.subr.mxu0 %v757
        %1160 = vmatpush1.msra.mxu0 %v756
        %1161 = vmatprep.subr.mxu0 %v753
        %1162 = vmatpush1.msra.mxu0 %v752
        %1163 = vmatprep.subr.mxu0 %v749
        %1164 = vmatpush1.msra.mxu0 %v748
        %1165 = vmatprep.subr.mxu0 %v873
        %1166 = vmatpush2.msra.mxu0 %v872
        %1167 = vmatprep.subr.mxu0 %v869
        %1168 = vmatpush2.msra.mxu0 %v868
        %1169 = vmatprep.subr.mxu0 %v865
        %1170 = vmatpush2.msra.mxu0 %v864
        %1171 = vmatprep.subr.mxu0 %v861
        %1172 = vmatpush2.msra.mxu0 %v860
        %1173 = vmatprep.subr.mxu0 %v857
        %1174 = vmatpush2.msra.mxu0 %v856
        %1175 = vmatprep.subr.mxu0 %v853
        %1176 = vmatpush2.msra.mxu0 %v852
        %1177 = vmatprep.subr.mxu0 %v849
        %1178 = vmatpush2.msra.mxu0 %v848
        %1179 = vmatprep.subr.mxu0 %v845
        %1180 = vmatpush2.msra.mxu0 %v844
        %1181 = vmatprep.subr.mxu0 %v841
        %1182 = vmatpush2.msra.mxu0 %v840
        %1183 = vmatprep.subr.mxu0 %v837
        %1184 = vmatpush2.msra.mxu0 %v836
        %1185 = vmatprep.subr.mxu0 %v833
        %1186 = vmatpush2.msra.mxu0 %v832
        %1187 = vmatprep.subr.mxu0 %v829
        %1188 = vmatpush2.msra.mxu0 %v828
        %1189 = vmatprep.subr.mxu0 %v825
        %1190 = vmatpush2.msra.mxu0 %v824
        %1191 = vmatprep.subr.mxu0 %v821
        %1192 = vmatpush2.msra.mxu0 %v820
        %1193 = vmatprep.subr.mxu0 %v817
        %1194 = vmatpush2.msra.mxu0 %v816
        %1195 = vmatprep.subr.mxu0 %v813
        %1196 = vmatpush2.msra.mxu0 %v812
        %1197 = vmatprep.mubr.f32.mxu0 %v495
        %1198 = vmatmul.mubr.f32.gmra.mxu0 %v494
        %v1199 = vpop.f32.mrf.mxu0
        %v1200 = vadd.f32 %v943, %v1199
        %v1201 = vpop.f32.mrf.mxu0
        %v1202 = vadd.f32 %v945, %v1201
        %1203 = vmatprep.mubr.f32.mxu0 %v499
        %1204 = vmatmul.mubr.f32.gmra.mxu0 %v498
        %v1205 = vpop.f32.mrf.mxu0
        %v1206 = vadd.f32 %v949, %v1205
        %v1207 = vpop.f32.mrf.mxu0
        %v1208 = vadd.f32 %v951, %v1207
        %1209 = vmatprep.mubr.f32.mxu0 %v503
        %1210 = vmatmul.mubr.f32.gmra.mxu0 %v502
        %v1211 = vpop.f32.mrf.mxu0
        %v1212 = vadd.f32 %v955, %v1211
        %v1213 = vpop.f32.mrf.mxu0
        %v1214 = vadd.f32 %v957, %v1213
        %1215 = vmatprep.mubr.f32.mxu0 %v507
        %1216 = vmatmul.mubr.f32.gmra.mxu0 %v506
        %v1217 = vpop.f32.mrf.mxu0
        %v1218 = vadd.f32 %v961, %v1217
        %v1219 = vpop.f32.mrf.mxu0
        %v1220 = vadd.f32 %v963, %v1219
        %1221 = vmatprep.mubr.f32.mxu0 %v511
        %1222 = vmatmul.mubr.f32.gmra.mxu0 %v510
        %v1223 = vpop.f32.mrf.mxu0
        %v1224 = vadd.f32 %v967, %v1223
        %v1225 = vpop.f32.mrf.mxu0
        %v1226 = vadd.f32 %v969, %v1225
        %1227 = vmatprep.mubr.f32.mxu0 %v515
        %1228 = vmatmul.mubr.f32.gmra.mxu0 %v514
        %v1229 = vpop.f32.mrf.mxu0
        %v1230 = vadd.f32 %v973, %v1229
        %v1231 = vpop.f32.mrf.mxu0
        %v1232 = vadd.f32 %v975, %v1231
        %1233 = vmatprep.mubr.f32.mxu0 %v519
        %1234 = vmatmul.mubr.f32.gmra.mxu0 %v518
        %v1235 = vpop.f32.mrf.mxu0
        %v1236 = vadd.f32 %v979, %v1235
        %v1237 = vpop.f32.mrf.mxu0
        %v1238 = vadd.f32 %v981, %v1237
        %1239 = vmatprep.mubr.f32.mxu0 %v523
        %1240 = vmatmul.mubr.f32.gmra.mxu0 %v522
        %v1241 = vpop.f32.mrf.mxu0
        %v1242 = vadd.f32 %v985, %v1241
        %v1243 = vpop.f32.mrf.mxu0
        %v1244 = vadd.f32 %v987, %v1243
        %1245 = vmatprep.mubr.f32.mxu0 %v527
        %1246 = vmatmul.mubr.f32.gmra.mxu0 %v526
        %v1247 = vpop.f32.mrf.mxu0
        %v1248 = vadd.f32 %v991, %v1247
        %v1249 = vpop.f32.mrf.mxu0
        %v1250 = vadd.f32 %v993, %v1249
        %1251 = vmatprep.mubr.f32.mxu0 %v531
        %1252 = vmatmul.mubr.f32.gmra.mxu0 %v530
        %v1253 = vpop.f32.mrf.mxu0
        %v1254 = vadd.f32 %v997, %v1253
        %v1255 = vpop.f32.mrf.mxu0
        %v1256 = vadd.f32 %v999, %v1255
        %1257 = vmatprep.mubr.f32.mxu0 %v535
        %1258 = vmatmul.mubr.f32.gmra.mxu0 %v534
        %v1259 = vpop.f32.mrf.mxu0
        %v1260 = vadd.f32 %v1003, %v1259
        %v1261 = vpop.f32.mrf.mxu0
        %v1262 = vadd.f32 %v1005, %v1261
        %1263 = vmatprep.mubr.f32.mxu0 %v539
        %1264 = vmatmul.mubr.f32.gmra.mxu0 %v538
        %v1265 = vpop.f32.mrf.mxu0
        %v1266 = vadd.f32 %v1009, %v1265
        %v1267 = vpop.f32.mrf.mxu0
        %v1268 = vadd.f32 %v1011, %v1267
        %1269 = vmatprep.mubr.f32.mxu0 %v543
        %1270 = vmatmul.mubr.f32.gmra.mxu0 %v542
        %v1271 = vpop.f32.mrf.mxu0
        %v1272 = vadd.f32 %v1015, %v1271
        %v1273 = vpop.f32.mrf.mxu0
        %v1274 = vadd.f32 %v1017, %v1273
        %1275 = vmatprep.mubr.f32.mxu0 %v547
        %1276 = vmatmul.mubr.f32.gmra.mxu0 %v546
        %v1277 = vpop.f32.mrf.mxu0
        %v1278 = vadd.f32 %v1021, %v1277
        %v1279 = vpop.f32.mrf.mxu0
        %v1280 = vadd.f32 %v1023, %v1279
        %1281 = vmatprep.mubr.f32.mxu0 %v551
        %1282 = vmatmul.mubr.f32.gmra.mxu0 %v550
        %v1283 = vpop.f32.mrf.mxu0
        %v1284 = vadd.f32 %v1027, %v1283
        %v1285 = vpop.f32.mrf.mxu0
        %v1286 = vadd.f32 %v1029, %v1285
        %1287 = vmatprep.mubr.f32.mxu0 %v555
        %1288 = vmatmul.mubr.f32.gmra.mxu0 %v554
        %v1289 = vpop.f32.mrf.mxu0
        %v1290 = vadd.f32 %v1033, %v1289
        %v1291 = vpop.f32.mrf.mxu0
        %v1292 = vadd.f32 %v1035, %v1291
        %1293 = vmatprep.mubr.f32.mxu0 %v559
        %1294 = vmatmul.mubr.f32.gmra.mxu0 %v558
        %v1295 = vpop.f32.mrf.mxu0
        %v1296 = vadd.f32 %v1039, %v1295
        %v1297 = vpop.f32.mrf.mxu0
        %v1298 = vadd.f32 %v1041, %v1297
        %1299 = vmatprep.mubr.f32.mxu0 %v563
        %1300 = vmatmul.mubr.f32.gmra.mxu0 %v562
        %v1301 = vpop.f32.mrf.mxu0
        %v1302 = vadd.f32 %v1045, %v1301
        %v1303 = vpop.f32.mrf.mxu0
        %v1304 = vadd.f32 %v1047, %v1303
        %1305 = vmatprep.mubr.f32.mxu0 %v567
        %1306 = vmatmul.mubr.f32.gmra.mxu0 %v566
        %v1307 = vpop.f32.mrf.mxu0
        %v1308 = vadd.f32 %v1051, %v1307
        %v1309 = vpop.f32.mrf.mxu0
        %v1310 = vadd.f32 %v1053, %v1309
        %1311 = vmatprep.mubr.f32.mxu0 %v571
        %1312 = vmatmul.mubr.f32.gmra.mxu0 %v570
        %v1313 = vpop.f32.mrf.mxu0
        %v1314 = vadd.f32 %v1057, %v1313
        %v1315 = vpop.f32.mrf.mxu0
        %v1316 = vadd.f32 %v1059, %v1315
        %1317 = vmatprep.mubr.f32.mxu0 %v575
        %1318 = vmatmul.mubr.f32.gmra.mxu0 %v574
        %v1319 = vpop.f32.mrf.mxu0
        %v1320 = vadd.f32 %v1063, %v1319
        %v1321 = vpop.f32.mrf.mxu0
        %v1322 = vadd.f32 %v1065, %v1321
        %1323 = vmatprep.mubr.f32.mxu0 %v579
        %1324 = vmatmul.mubr.f32.gmra.mxu0 %v578
        %v1325 = vpop.f32.mrf.mxu0
        %v1326 = vadd.f32 %v1069, %v1325
        %v1327 = vpop.f32.mrf.mxu0
        %v1328 = vadd.f32 %v1071, %v1327
        %1329 = vmatprep.mubr.f32.mxu0 %v583
        %1330 = vmatmul.mubr.f32.gmra.mxu0 %v582
        %v1331 = vpop.f32.mrf.mxu0
        %v1332 = vadd.f32 %v1075, %v1331
        %v1333 = vpop.f32.mrf.mxu0
        %v1334 = vadd.f32 %v1077, %v1333
        %1335 = vmatprep.mubr.f32.mxu0 %v587
        %1336 = vmatmul.mubr.f32.gmra.mxu0 %v586
        %v1337 = vpop.f32.mrf.mxu0
        %v1338 = vadd.f32 %v1081, %v1337
        %v1339 = vpop.f32.mrf.mxu0
        %v1340 = vadd.f32 %v1083, %v1339
        %1341 = vmatprep.mubr.f32.mxu0 %v591
        %1342 = vmatmul.mubr.f32.gmra.mxu0 %v590
        %v1343 = vpop.f32.mrf.mxu0
        %v1344 = vadd.f32 %v1087, %v1343
        %v1345 = vpop.f32.mrf.mxu0
        %v1346 = vadd.f32 %v1089, %v1345
        %1347 = vmatprep.mubr.f32.mxu0 %v595
        %1348 = vmatmul.mubr.f32.gmra.mxu0 %v594
        %v1349 = vpop.f32.mrf.mxu0
        %v1350 = vadd.f32 %v1093, %v1349
        %v1351 = vpop.f32.mrf.mxu0
        %v1352 = vadd.f32 %v1095, %v1351
        %1353 = vmatprep.mubr.f32.mxu0 %v599
        %1354 = vmatmul.mubr.f32.gmra.mxu0 %v598
        %v1355 = vpop.f32.mrf.mxu0
        %v1356 = vadd.f32 %v1099, %v1355
        %v1357 = vpop.f32.mrf.mxu0
        %v1358 = vadd.f32 %v1101, %v1357
        %1359 = vmatprep.mubr.f32.mxu0 %v603
        %1360 = vmatmul.mubr.f32.gmra.mxu0 %v602
        %v1361 = vpop.f32.mrf.mxu0
        %v1362 = vadd.f32 %v1105, %v1361
        %v1363 = vpop.f32.mrf.mxu0
        %v1364 = vadd.f32 %v1107, %v1363
        %1365 = vmatprep.mubr.f32.mxu0 %v607
        %1366 = vmatmul.mubr.f32.gmra.mxu0 %v606
        %v1367 = vpop.f32.mrf.mxu0
        %v1368 = vadd.f32 %v1111, %v1367
        %v1369 = vpop.f32.mrf.mxu0
        %v1370 = vadd.f32 %v1113, %v1369
        %1371 = vmatprep.mubr.f32.mxu0 %v611
        %1372 = vmatmul.mubr.f32.gmra.mxu0 %v610
        %v1373 = vpop.f32.mrf.mxu0
        %v1374 = vadd.f32 %v1117, %v1373
        %v1375 = vpop.f32.mrf.mxu0
        %v1376 = vadd.f32 %v1119, %v1375
        %1377 = vmatprep.mubr.f32.mxu0 %v615
        %1378 = vmatmul.mubr.f32.gmra.mxu0 %v614
        %v1379 = vpop.f32.mrf.mxu0
        %v1380 = vadd.f32 %v1123, %v1379
        %v1381 = vpop.f32.mrf.mxu0
        %v1382 = vadd.f32 %v1125, %v1381
        %1383 = vmatprep.mubr.f32.mxu0 %v619
        %1384 = vmatmul.mubr.f32.gmra.mxu0 %v618
        %v1385 = vpop.f32.mrf.mxu0
        %v1386 = vadd.f32 %v1129, %v1385
        %v1387 = vpop.f32.mrf.mxu0
        %v1388 = vadd.f32 %v1131, %v1387
        %1389 = vdwg.mxu0
        %1390 = vmatprep.subr.mxu0 %v683
        %1391 = vmatpush1.msra.mxu0 %v682
        %1392 = vmatprep.subr.mxu0 %v679
        %1393 = vmatpush1.msra.mxu0 %v678
        %1394 = vmatprep.subr.mxu0 %v675
        %1395 = vmatpush1.msra.mxu0 %v674
        %1396 = vmatprep.subr.mxu0 %v671
        %1397 = vmatpush1.msra.mxu0 %v670
        %1398 = vmatprep.subr.mxu0 %v667
        %1399 = vmatpush1.msra.mxu0 %v666
        %1400 = vmatprep.subr.mxu0 %v663
        %1401 = vmatpush1.msra.mxu0 %v662
        %1402 = vmatprep.subr.mxu0 %v659
        %1403 = vmatpush1.msra.mxu0 %v658
        %1404 = vmatprep.subr.mxu0 %v655
        %1405 = vmatpush1.msra.mxu0 %v654
        %1406 = vmatprep.subr.mxu0 %v651
        %1407 = vmatpush1.msra.mxu0 %v650
        %1408 = vmatprep.subr.mxu0 %v647
        %1409 = vmatpush1.msra.mxu0 %v646
        %1410 = vmatprep.subr.mxu0 %v643
        %1411 = vmatpush1.msra.mxu0 %v642
        %1412 = vmatprep.subr.mxu0 %v639
        %1413 = vmatpush1.msra.mxu0 %v638
        %1414 = vmatprep.subr.mxu0 %v635
        %1415 = vmatpush1.msra.mxu0 %v634
        %1416 = vmatprep.subr.mxu0 %v631
        %1417 = vmatpush1.msra.mxu0 %v630
        %1418 = vmatprep.subr.mxu0 %v627
        %1419 = vmatpush1.msra.mxu0 %v626
        %1420 = vmatprep.subr.mxu0 %v623
        %1421 = vmatpush1.msra.mxu0 %v622
        %1422 = vmatprep.subr.mxu0 %v747
        %1423 = vmatpush2.msra.mxu0 %v746
        %1424 = vmatprep.subr.mxu0 %v743
        %1425 = vmatpush2.msra.mxu0 %v742
        %1426 = vmatprep.subr.mxu0 %v739
        %1427 = vmatpush2.msra.mxu0 %v738
        %1428 = vmatprep.subr.mxu0 %v735
        %1429 = vmatpush2.msra.mxu0 %v734
        %1430 = vmatprep.subr.mxu0 %v731
        %1431 = vmatpush2.msra.mxu0 %v730
        %1432 = vmatprep.subr.mxu0 %v727
        %1433 = vmatpush2.msra.mxu0 %v726
        %1434 = vmatprep.subr.mxu0 %v723
        %1435 = vmatpush2.msra.mxu0 %v722
        %1436 = vmatprep.subr.mxu0 %v719
        %1437 = vmatpush2.msra.mxu0 %v718
        %1438 = vmatprep.subr.mxu0 %v715
        %1439 = vmatpush2.msra.mxu0 %v714
        %1440 = vmatprep.subr.mxu0 %v711
        %1441 = vmatpush2.msra.mxu0 %v710
        %1442 = vmatprep.subr.mxu0 %v707
        %1443 = vmatpush2.msra.mxu0 %v706
        %1444 = vmatprep.subr.mxu0 %v703
        %1445 = vmatpush2.msra.mxu0 %v702
        %1446 = vmatprep.subr.mxu0 %v699
        %1447 = vmatpush2.msra.mxu0 %v698
        %1448 = vmatprep.subr.mxu0 %v695
        %1449 = vmatpush2.msra.mxu0 %v694
        %1450 = vmatprep.subr.mxu0 %v691
        %1451 = vmatpush2.msra.mxu0 %v690
        %1452 = vmatprep.subr.mxu0 %v687
        %1453 = vmatpush2.msra.mxu0 %v686
        %1454 = vmatprep.mubr.f32.mxu0 %v493
        %1455 = vmatmul.mubr.f32.gmra.mxu0 %v492
        %v1456 = vpop.f32.mrf.mxu0
        %v1457 = vadd.f32 0.0, %v1456
        %v1458 = vpop.f32.mrf.mxu0
        %v1459 = vadd.f32 0.0, %v1458
        %1460 = vmatprep.mubr.f32.mxu0 %v497
        %1461 = vmatmul.mubr.f32.gmra.mxu0 %v496
        %v1462 = vpop.f32.mrf.mxu0
        %v1463 = vadd.f32 0.0, %v1462
        %v1464 = vpop.f32.mrf.mxu0
        %v1465 = vadd.f32 0.0, %v1464
        %1466 = vmatprep.mubr.f32.mxu0 %v501
        %1467 = vmatmul.mubr.f32.gmra.mxu0 %v500
        %v1468 = vpop.f32.mrf.mxu0
        %v1469 = vadd.f32 0.0, %v1468
        %v1470 = vpop.f32.mrf.mxu0
        %v1471 = vadd.f32 0.0, %v1470
        %1472 = vmatprep.mubr.f32.mxu0 %v505
        %1473 = vmatmul.mubr.f32.gmra.mxu0 %v504
        %v1474 = vpop.f32.mrf.mxu0
        %v1475 = vadd.f32 0.0, %v1474
        %v1476 = vpop.f32.mrf.mxu0
        %v1477 = vadd.f32 0.0, %v1476
        %1478 = vmatprep.mubr.f32.mxu0 %v509
        %1479 = vmatmul.mubr.f32.gmra.mxu0 %v508
        %v1480 = vpop.f32.mrf.mxu0
        %v1481 = vadd.f32 0.0, %v1480
        %v1482 = vpop.f32.mrf.mxu0
        %v1483 = vadd.f32 0.0, %v1482
        %1484 = vmatprep.mubr.f32.mxu0 %v513
        %1485 = vmatmul.mubr.f32.gmra.mxu0 %v512
        %v1486 = vpop.f32.mrf.mxu0
        %v1487 = vadd.f32 0.0, %v1486
        %v1488 = vpop.f32.mrf.mxu0
        %v1489 = vadd.f32 0.0, %v1488
        %1490 = vmatprep.mubr.f32.mxu0 %v517
        %1491 = vmatmul.mubr.f32.gmra.mxu0 %v516
        %v1492 = vpop.f32.mrf.mxu0
        %v1493 = vadd.f32 0.0, %v1492
        %v1494 = vpop.f32.mrf.mxu0
        %v1495 = vadd.f32 0.0, %v1494
        %1496 = vmatprep.mubr.f32.mxu0 %v521
        %1497 = vmatmul.mubr.f32.gmra.mxu0 %v520
        %v1498 = vpop.f32.mrf.mxu0
        %v1499 = vadd.f32 0.0, %v1498
        %v1500 = vpop.f32.mrf.mxu0
        %v1501 = vadd.f32 0.0, %v1500
        %1502 = vmatprep.mubr.f32.mxu0 %v525
        %1503 = vmatmul.mubr.f32.gmra.mxu0 %v524
        %v1504 = vpop.f32.mrf.mxu0
        %v1505 = vadd.f32 0.0, %v1504
        %v1506 = vpop.f32.mrf.mxu0
        %v1507 = vadd.f32 0.0, %v1506
        %1508 = vmatprep.mubr.f32.mxu0 %v529
        %1509 = vmatmul.mubr.f32.gmra.mxu0 %v528
        %v1510 = vpop.f32.mrf.mxu0
        %v1511 = vadd.f32 0.0, %v1510
        %v1512 = vpop.f32.mrf.mxu0
        %v1513 = vadd.f32 0.0, %v1512
        %1514 = vmatprep.mubr.f32.mxu0 %v533
        %1515 = vmatmul.mubr.f32.gmra.mxu0 %v532
        %v1516 = vpop.f32.mrf.mxu0
        %v1517 = vadd.f32 0.0, %v1516
        %v1518 = vpop.f32.mrf.mxu0
        %v1519 = vadd.f32 0.0, %v1518
        %1520 = vmatprep.mubr.f32.mxu0 %v537
        %1521 = vmatmul.mubr.f32.gmra.mxu0 %v536
        %v1522 = vpop.f32.mrf.mxu0
        %v1523 = vadd.f32 0.0, %v1522
        %v1524 = vpop.f32.mrf.mxu0
        %v1525 = vadd.f32 0.0, %v1524
        %1526 = vmatprep.mubr.f32.mxu0 %v541
        %1527 = vmatmul.mubr.f32.gmra.mxu0 %v540
        %v1528 = vpop.f32.mrf.mxu0
        %v1529 = vadd.f32 0.0, %v1528
        %v1530 = vpop.f32.mrf.mxu0
        %v1531 = vadd.f32 0.0, %v1530
        %1532 = vmatprep.mubr.f32.mxu0 %v545
        %1533 = vmatmul.mubr.f32.gmra.mxu0 %v544
        %v1534 = vpop.f32.mrf.mxu0
        %v1535 = vadd.f32 0.0, %v1534
        %v1536 = vpop.f32.mrf.mxu0
        %v1537 = vadd.f32 0.0, %v1536
        %1538 = vmatprep.mubr.f32.mxu0 %v549
        %1539 = vmatmul.mubr.f32.gmra.mxu0 %v548
        %v1540 = vpop.f32.mrf.mxu0
        %v1541 = vadd.f32 0.0, %v1540
        %v1542 = vpop.f32.mrf.mxu0
        %v1543 = vadd.f32 0.0, %v1542
        %1544 = vmatprep.mubr.f32.mxu0 %v553
        %1545 = vmatmul.mubr.f32.gmra.mxu0 %v552
        %v1546 = vpop.f32.mrf.mxu0
        %v1547 = vadd.f32 0.0, %v1546
        %v1548 = vpop.f32.mrf.mxu0
        %v1549 = vadd.f32 0.0, %v1548
        %1550 = vmatprep.mubr.f32.mxu0 %v557
        %1551 = vmatmul.mubr.f32.gmra.mxu0 %v556
        %v1552 = vpop.f32.mrf.mxu0
        %v1553 = vadd.f32 0.0, %v1552
        %v1554 = vpop.f32.mrf.mxu0
        %v1555 = vadd.f32 0.0, %v1554
        %1556 = vmatprep.mubr.f32.mxu0 %v561
        %1557 = vmatmul.mubr.f32.gmra.mxu0 %v560
        %v1558 = vpop.f32.mrf.mxu0
        %v1559 = vadd.f32 0.0, %v1558
        %v1560 = vpop.f32.mrf.mxu0
        %v1561 = vadd.f32 0.0, %v1560
        %1562 = vmatprep.mubr.f32.mxu0 %v565
        %1563 = vmatmul.mubr.f32.gmra.mxu0 %v564
        %v1564 = vpop.f32.mrf.mxu0
        %v1565 = vadd.f32 0.0, %v1564
        %v1566 = vpop.f32.mrf.mxu0
        %v1567 = vadd.f32 0.0, %v1566
        %1568 = vmatprep.mubr.f32.mxu0 %v569
        %1569 = vmatmul.mubr.f32.gmra.mxu0 %v568
        %v1570 = vpop.f32.mrf.mxu0
        %v1571 = vadd.f32 0.0, %v1570
        %v1572 = vpop.f32.mrf.mxu0
        %v1573 = vadd.f32 0.0, %v1572
        %1574 = vmatprep.mubr.f32.mxu0 %v573
        %1575 = vmatmul.mubr.f32.gmra.mxu0 %v572
        %v1576 = vpop.f32.mrf.mxu0
        %v1577 = vadd.f32 0.0, %v1576
        %v1578 = vpop.f32.mrf.mxu0
        %v1579 = vadd.f32 0.0, %v1578
        %1580 = vmatprep.mubr.f32.mxu0 %v577
        %1581 = vmatmul.mubr.f32.gmra.mxu0 %v576
        %v1582 = vpop.f32.mrf.mxu0
        %v1583 = vadd.f32 0.0, %v1582
        %v1584 = vpop.f32.mrf.mxu0
        %v1585 = vadd.f32 0.0, %v1584
        %1586 = vmatprep.mubr.f32.mxu0 %v581
        %1587 = vmatmul.mubr.f32.gmra.mxu0 %v580
        %v1588 = vpop.f32.mrf.mxu0
        %v1589 = vadd.f32 0.0, %v1588
        %v1590 = vpop.f32.mrf.mxu0
        %v1591 = vadd.f32 0.0, %v1590
        %1592 = vmatprep.mubr.f32.mxu0 %v585
        %1593 = vmatmul.mubr.f32.gmra.mxu0 %v584
        %v1594 = vpop.f32.mrf.mxu0
        %v1595 = vadd.f32 0.0, %v1594
        %v1596 = vpop.f32.mrf.mxu0
        %v1597 = vadd.f32 0.0, %v1596
        %1598 = vmatprep.mubr.f32.mxu0 %v589
        %1599 = vmatmul.mubr.f32.gmra.mxu0 %v588
        %v1600 = vpop.f32.mrf.mxu0
        %v1601 = vadd.f32 0.0, %v1600
        %v1602 = vpop.f32.mrf.mxu0
        %v1603 = vadd.f32 0.0, %v1602
        %1604 = vmatprep.mubr.f32.mxu0 %v593
        %1605 = vmatmul.mubr.f32.gmra.mxu0 %v592
        %v1606 = vpop.f32.mrf.mxu0
        %v1607 = vadd.f32 0.0, %v1606
        %v1608 = vpop.f32.mrf.mxu0
        %v1609 = vadd.f32 0.0, %v1608
        %1610 = vmatprep.mubr.f32.mxu0 %v597
        %1611 = vmatmul.mubr.f32.gmra.mxu0 %v596
        %v1612 = vpop.f32.mrf.mxu0
        %v1613 = vadd.f32 0.0, %v1612
        %v1614 = vpop.f32.mrf.mxu0
        %v1615 = vadd.f32 0.0, %v1614
        %1616 = vmatprep.mubr.f32.mxu0 %v601
        %1617 = vmatmul.mubr.f32.gmra.mxu0 %v600
        %v1618 = vpop.f32.mrf.mxu0
        %v1619 = vadd.f32 0.0, %v1618
        %v1620 = vpop.f32.mrf.mxu0
        %v1621 = vadd.f32 0.0, %v1620
        %1622 = vmatprep.mubr.f32.mxu0 %v605
        %1623 = vmatmul.mubr.f32.gmra.mxu0 %v604
        %v1624 = vpop.f32.mrf.mxu0
        %v1625 = vadd.f32 0.0, %v1624
        %v1626 = vpop.f32.mrf.mxu0
        %v1627 = vadd.f32 0.0, %v1626
        %1628 = vmatprep.mubr.f32.mxu0 %v609
        %1629 = vmatmul.mubr.f32.gmra.mxu0 %v608
        %v1630 = vpop.f32.mrf.mxu0
        %v1631 = vadd.f32 0.0, %v1630
        %v1632 = vpop.f32.mrf.mxu0
        %v1633 = vadd.f32 0.0, %v1632
        %1634 = vmatprep.mubr.f32.mxu0 %v613
        %1635 = vmatmul.mubr.f32.gmra.mxu0 %v612
        %v1636 = vpop.f32.mrf.mxu0
        %v1637 = vadd.f32 0.0, %v1636
        %v1638 = vpop.f32.mrf.mxu0
        %v1639 = vadd.f32 0.0, %v1638
        %1640 = vmatprep.mubr.f32.mxu0 %v617
        %1641 = vmatmul.mubr.f32.gmra.mxu0 %v616
        %v1642 = vpop.f32.mrf.mxu0
        %v1643 = vadd.f32 0.0, %v1642
        %v1644 = vpop.f32.mrf.mxu0
        %v1645 = vadd.f32 0.0, %v1644
        %1646 = vdwg.mxu0
        %1647 = vmatprep.subr.mxu0 %v811
        %1648 = vmatpush1.msra.mxu0 %v810
        %1649 = vmatprep.subr.mxu0 %v807
        %1650 = vmatpush1.msra.mxu0 %v806
        %1651 = vmatprep.subr.mxu0 %v803
        %1652 = vmatpush1.msra.mxu0 %v802
        %1653 = vmatprep.subr.mxu0 %v799
        %1654 = vmatpush1.msra.mxu0 %v798
        %1655 = vmatprep.subr.mxu0 %v795
        %1656 = vmatpush1.msra.mxu0 %v794
        %1657 = vmatprep.subr.mxu0 %v791
        %1658 = vmatpush1.msra.mxu0 %v790
        %1659 = vmatprep.subr.mxu0 %v787
        %1660 = vmatpush1.msra.mxu0 %v786
        %1661 = vmatprep.subr.mxu0 %v783
        %1662 = vmatpush1.msra.mxu0 %v782
        %1663 = vmatprep.subr.mxu0 %v779
        %1664 = vmatpush1.msra.mxu0 %v778
        %1665 = vmatprep.subr.mxu0 %v775
        %1666 = vmatpush1.msra.mxu0 %v774
        %1667 = vmatprep.subr.mxu0 %v771
        %1668 = vmatpush1.msra.mxu0 %v770
        %1669 = vmatprep.subr.mxu0 %v767
        %1670 = vmatpush1.msra.mxu0 %v766
        %1671 = vmatprep.subr.mxu0 %v763
        %1672 = vmatpush1.msra.mxu0 %v762
        %1673 = vmatprep.subr.mxu0 %v759
        %1674 = vmatpush1.msra.mxu0 %v758
        %1675 = vmatprep.subr.mxu0 %v755
        %1676 = vmatpush1.msra.mxu0 %v754
        %1677 = vmatprep.subr.mxu0 %v751
        %1678 = vmatpush1.msra.mxu0 %v750
        %1679 = vmatprep.subr.mxu0 %v875
        %1680 = vmatpush2.msra.mxu0 %v874
        %1681 = vmatprep.subr.mxu0 %v871
        %1682 = vmatpush2.msra.mxu0 %v870
        %1683 = vmatprep.subr.mxu0 %v867
        %1684 = vmatpush2.msra.mxu0 %v866
        %1685 = vmatprep.subr.mxu0 %v863
        %1686 = vmatpush2.msra.mxu0 %v862
        %1687 = vmatprep.subr.mxu0 %v859
        %1688 = vmatpush2.msra.mxu0 %v858
        %1689 = vmatprep.subr.mxu0 %v855
        %1690 = vmatpush2.msra.mxu0 %v854
        %1691 = vmatprep.subr.mxu0 %v851
        %1692 = vmatpush2.msra.mxu0 %v850
        %1693 = vmatprep.subr.mxu0 %v847
        %1694 = vmatpush2.msra.mxu0 %v846
        %1695 = vmatprep.subr.mxu0 %v843
        %1696 = vmatpush2.msra.mxu0 %v842
        %1697 = vmatprep.subr.mxu0 %v839
        %1698 = vmatpush2.msra.mxu0 %v838
        %1699 = vmatprep.subr.mxu0 %v835
        %1700 = vmatpush2.msra.mxu0 %v834
        %1701 = vmatprep.subr.mxu0 %v831
        %1702 = vmatpush2.msra.mxu0 %v830
        %1703 = vmatprep.subr.mxu0 %v827
        %1704 = vmatpush2.msra.mxu0 %v826
        %1705 = vmatprep.subr.mxu0 %v823
        %1706 = vmatpush2.msra.mxu0 %v822
        %1707 = vmatprep.subr.mxu0 %v819
        %1708 = vmatpush2.msra.mxu0 %v818
        %1709 = vmatprep.subr.mxu0 %v815
        %1710 = vmatpush2.msra.mxu0 %v814
        %1711 = vmatprep.mubr.f32.mxu0 %v495
        %1712 = vmatmul.mubr.f32.gmra.mxu0 %v494
        %v1713 = vpop.f32.mrf.mxu0
        %v1714 = vadd.f32 %v1457, %v1713
        %v1715 = vpop.f32.mrf.mxu0
        %v1716 = vadd.f32 %v1459, %v1715
        %1717 = vmatprep.mubr.f32.mxu0 %v499
        %1718 = vmatmul.mubr.f32.gmra.mxu0 %v498
        %v1719 = vpop.f32.mrf.mxu0
        %v1720 = vadd.f32 %v1463, %v1719
        %v1721 = vpop.f32.mrf.mxu0
        %v1722 = vadd.f32 %v1465, %v1721
        %1723 = vmatprep.mubr.f32.mxu0 %v503
        %1724 = vmatmul.mubr.f32.gmra.mxu0 %v502
        %v1725 = vpop.f32.mrf.mxu0
        %v1726 = vadd.f32 %v1469, %v1725
        %v1727 = vpop.f32.mrf.mxu0
        %v1728 = vadd.f32 %v1471, %v1727
        %1729 = vmatprep.mubr.f32.mxu0 %v507
        %1730 = vmatmul.mubr.f32.gmra.mxu0 %v506
        %v1731 = vpop.f32.mrf.mxu0
        %v1732 = vadd.f32 %v1475, %v1731
        %v1733 = vpop.f32.mrf.mxu0
        %v1734 = vadd.f32 %v1477, %v1733
        %1735 = vmatprep.mubr.f32.mxu0 %v511
        %1736 = vmatmul.mubr.f32.gmra.mxu0 %v510
        %v1737 = vpop.f32.mrf.mxu0
        %v1738 = vadd.f32 %v1481, %v1737
        %v1739 = vpop.f32.mrf.mxu0
        %v1740 = vadd.f32 %v1483, %v1739
        %1741 = vmatprep.mubr.f32.mxu0 %v515
        %1742 = vmatmul.mubr.f32.gmra.mxu0 %v514
        %v1743 = vpop.f32.mrf.mxu0
        %v1744 = vadd.f32 %v1487, %v1743
        %v1745 = vpop.f32.mrf.mxu0
        %v1746 = vadd.f32 %v1489, %v1745
        %1747 = vmatprep.mubr.f32.mxu0 %v519
        %1748 = vmatmul.mubr.f32.gmra.mxu0 %v518
        %v1749 = vpop.f32.mrf.mxu0
        %v1750 = vadd.f32 %v1493, %v1749
        %v1751 = vpop.f32.mrf.mxu0
        %v1752 = vadd.f32 %v1495, %v1751
        %1753 = vmatprep.mubr.f32.mxu0 %v523
        %1754 = vmatmul.mubr.f32.gmra.mxu0 %v522
        %v1755 = vpop.f32.mrf.mxu0
        %v1756 = vadd.f32 %v1499, %v1755
        %v1757 = vpop.f32.mrf.mxu0
        %v1758 = vadd.f32 %v1501, %v1757
        %1759 = vmatprep.mubr.f32.mxu0 %v527
        %1760 = vmatmul.mubr.f32.gmra.mxu0 %v526
        %v1761 = vpop.f32.mrf.mxu0
        %v1762 = vadd.f32 %v1505, %v1761
        %v1763 = vpop.f32.mrf.mxu0
        %v1764 = vadd.f32 %v1507, %v1763
        %1765 = vmatprep.mubr.f32.mxu0 %v531
        %1766 = vmatmul.mubr.f32.gmra.mxu0 %v530
        %v1767 = vpop.f32.mrf.mxu0
        %v1768 = vadd.f32 %v1511, %v1767
        %v1769 = vpop.f32.mrf.mxu0
        %v1770 = vadd.f32 %v1513, %v1769
        %1771 = vmatprep.mubr.f32.mxu0 %v535
        %1772 = vmatmul.mubr.f32.gmra.mxu0 %v534
        %v1773 = vpop.f32.mrf.mxu0
        %v1774 = vadd.f32 %v1517, %v1773
        %v1775 = vpop.f32.mrf.mxu0
        %v1776 = vadd.f32 %v1519, %v1775
        %1777 = vmatprep.mubr.f32.mxu0 %v539
        %1778 = vmatmul.mubr.f32.gmra.mxu0 %v538
        %v1779 = vpop.f32.mrf.mxu0
        %v1780 = vadd.f32 %v1523, %v1779
        %v1781 = vpop.f32.mrf.mxu0
        %v1782 = vadd.f32 %v1525, %v1781
        %1783 = vmatprep.mubr.f32.mxu0 %v543
        %1784 = vmatmul.mubr.f32.gmra.mxu0 %v542
        %v1785 = vpop.f32.mrf.mxu0
        %v1786 = vadd.f32 %v1529, %v1785
        %v1787 = vpop.f32.mrf.mxu0
        %v1788 = vadd.f32 %v1531, %v1787
        %1789 = vmatprep.mubr.f32.mxu0 %v547
        %1790 = vmatmul.mubr.f32.gmra.mxu0 %v546
        %v1791 = vpop.f32.mrf.mxu0
        %v1792 = vadd.f32 %v1535, %v1791
        %v1793 = vpop.f32.mrf.mxu0
        %v1794 = vadd.f32 %v1537, %v1793
        %1795 = vmatprep.mubr.f32.mxu0 %v551
        %1796 = vmatmul.mubr.f32.gmra.mxu0 %v550
        %v1797 = vpop.f32.mrf.mxu0
        %v1798 = vadd.f32 %v1541, %v1797
        %v1799 = vpop.f32.mrf.mxu0
        %v1800 = vadd.f32 %v1543, %v1799
        %1801 = vmatprep.mubr.f32.mxu0 %v555
        %1802 = vmatmul.mubr.f32.gmra.mxu0 %v554
        %v1803 = vpop.f32.mrf.mxu0
        %v1804 = vadd.f32 %v1547, %v1803
        %v1805 = vpop.f32.mrf.mxu0
        %v1806 = vadd.f32 %v1549, %v1805
        %1807 = vmatprep.mubr.f32.mxu0 %v559
        %1808 = vmatmul.mubr.f32.gmra.mxu0 %v558
        %v1809 = vpop.f32.mrf.mxu0
        %v1810 = vadd.f32 %v1553, %v1809
        %v1811 = vpop.f32.mrf.mxu0
        %v1812 = vadd.f32 %v1555, %v1811
        %1813 = vmatprep.mubr.f32.mxu0 %v563
        %1814 = vmatmul.mubr.f32.gmra.mxu0 %v562
        %v1815 = vpop.f32.mrf.mxu0
        %v1816 = vadd.f32 %v1559, %v1815
        %v1817 = vpop.f32.mrf.mxu0
        %v1818 = vadd.f32 %v1561, %v1817
        %1819 = vmatprep.mubr.f32.mxu0 %v567
        %1820 = vmatmul.mubr.f32.gmra.mxu0 %v566
        %v1821 = vpop.f32.mrf.mxu0
        %v1822 = vadd.f32 %v1565, %v1821
        %v1823 = vpop.f32.mrf.mxu0
        %v1824 = vadd.f32 %v1567, %v1823
        %1825 = vmatprep.mubr.f32.mxu0 %v571
        %1826 = vmatmul.mubr.f32.gmra.mxu0 %v570
        %v1827 = vpop.f32.mrf.mxu0
        %v1828 = vadd.f32 %v1571, %v1827
        %v1829 = vpop.f32.mrf.mxu0
        %v1830 = vadd.f32 %v1573, %v1829
        %1831 = vmatprep.mubr.f32.mxu0 %v575
        %1832 = vmatmul.mubr.f32.gmra.mxu0 %v574
        %v1833 = vpop.f32.mrf.mxu0
        %v1834 = vadd.f32 %v1577, %v1833
        %v1835 = vpop.f32.mrf.mxu0
        %v1836 = vadd.f32 %v1579, %v1835
        %1837 = vmatprep.mubr.f32.mxu0 %v579
        %1838 = vmatmul.mubr.f32.gmra.mxu0 %v578
        %v1839 = vpop.f32.mrf.mxu0
        %v1840 = vadd.f32 %v1583, %v1839
        %v1841 = vpop.f32.mrf.mxu0
        %v1842 = vadd.f32 %v1585, %v1841
        %1843 = vmatprep.mubr.f32.mxu0 %v583
        %1844 = vmatmul.mubr.f32.gmra.mxu0 %v582
        %v1845 = vpop.f32.mrf.mxu0
        %v1846 = vadd.f32 %v1589, %v1845
        %v1847 = vpop.f32.mrf.mxu0
        %v1848 = vadd.f32 %v1591, %v1847
        %1849 = vmatprep.mubr.f32.mxu0 %v587
        %1850 = vmatmul.mubr.f32.gmra.mxu0 %v586
        %v1851 = vpop.f32.mrf.mxu0
        %v1852 = vadd.f32 %v1595, %v1851
        %v1853 = vpop.f32.mrf.mxu0
        %v1854 = vadd.f32 %v1597, %v1853
        %1855 = vmatprep.mubr.f32.mxu0 %v591
        %1856 = vmatmul.mubr.f32.gmra.mxu0 %v590
        %v1857 = vpop.f32.mrf.mxu0
        %v1858 = vadd.f32 %v1601, %v1857
        %v1859 = vpop.f32.mrf.mxu0
        %v1860 = vadd.f32 %v1603, %v1859
        %1861 = vmatprep.mubr.f32.mxu0 %v595
        %1862 = vmatmul.mubr.f32.gmra.mxu0 %v594
        %v1863 = vpop.f32.mrf.mxu0
        %v1864 = vadd.f32 %v1607, %v1863
        %v1865 = vpop.f32.mrf.mxu0
        %v1866 = vadd.f32 %v1609, %v1865
        %1867 = vmatprep.mubr.f32.mxu0 %v599
        %1868 = vmatmul.mubr.f32.gmra.mxu0 %v598
        %v1869 = vpop.f32.mrf.mxu0
        %v1870 = vadd.f32 %v1613, %v1869
        %v1871 = vpop.f32.mrf.mxu0
        %v1872 = vadd.f32 %v1615, %v1871
        %1873 = vmatprep.mubr.f32.mxu0 %v603
        %1874 = vmatmul.mubr.f32.gmra.mxu0 %v602
        %v1875 = vpop.f32.mrf.mxu0
        %v1876 = vadd.f32 %v1619, %v1875
        %v1877 = vpop.f32.mrf.mxu0
        %v1878 = vadd.f32 %v1621, %v1877
        %1879 = vmatprep.mubr.f32.mxu0 %v607
        %1880 = vmatmul.mubr.f32.gmra.mxu0 %v606
        %v1881 = vpop.f32.mrf.mxu0
        %v1882 = vadd.f32 %v1625, %v1881
        %v1883 = vpop.f32.mrf.mxu0
        %v1884 = vadd.f32 %v1627, %v1883
        %1885 = vmatprep.mubr.f32.mxu0 %v611
        %1886 = vmatmul.mubr.f32.gmra.mxu0 %v610
        %v1887 = vpop.f32.mrf.mxu0
        %v1888 = vadd.f32 %v1631, %v1887
        %v1889 = vpop.f32.mrf.mxu0
        %v1890 = vadd.f32 %v1633, %v1889
        %1891 = vmatprep.mubr.f32.mxu0 %v615
        %1892 = vmatmul.mubr.f32.gmra.mxu0 %v614
        %v1893 = vpop.f32.mrf.mxu0
        %v1894 = vadd.f32 %v1637, %v1893
        %v1895 = vpop.f32.mrf.mxu0
        %v1896 = vadd.f32 %v1639, %v1895
        %1897 = vmatprep.mubr.f32.mxu0 %v619
        %1898 = vmatmul.mubr.f32.gmra.mxu0 %v618
        %v1899 = vpop.f32.mrf.mxu0
        %v1900 = vadd.f32 %v1643, %v1899
        %v1901 = vpop.f32.mrf.mxu0
        %v1902 = vadd.f32 %v1645, %v1901
        %1903 = vdwg.mxu0
        %v1904 = vadd.f32 %v364, %v1200
        %v1905 = vadd.f32 %v365, %v1202
        %v1906 = vadd.f32 %v366, %v1714
        %v1907 = vadd.f32 %v367, %v1716
        %v1908 = vadd.f32 %v368, %v1206
        %v1909 = vadd.f32 %v369, %v1208
        %v1910 = vadd.f32 %v370, %v1720
        %v1911 = vadd.f32 %v371, %v1722
        %v1912 = vadd.f32 %v372, %v1212
        %v1913 = vadd.f32 %v373, %v1214
        %v1914 = vadd.f32 %v374, %v1726
        %v1915 = vadd.f32 %v375, %v1728
        %v1916 = vadd.f32 %v376, %v1218
        %v1917 = vadd.f32 %v377, %v1220
        %v1918 = vadd.f32 %v378, %v1732
        %v1919 = vadd.f32 %v379, %v1734
        %v1920 = vadd.f32 %v380, %v1224
        %v1921 = vadd.f32 %v381, %v1226
        %v1922 = vadd.f32 %v382, %v1738
        %v1923 = vadd.f32 %v383, %v1740
        %v1924 = vadd.f32 %v384, %v1230
        %v1925 = vadd.f32 %v385, %v1232
        %v1926 = vadd.f32 %v386, %v1744
        %v1927 = vadd.f32 %v387, %v1746
        %v1928 = vadd.f32 %v388, %v1236
        %v1929 = vadd.f32 %v389, %v1238
        %v1930 = vadd.f32 %v390, %v1750
        %v1931 = vadd.f32 %v391, %v1752
        %v1932 = vadd.f32 %v392, %v1242
        %v1933 = vadd.f32 %v393, %v1244
        %v1934 = vadd.f32 %v394, %v1756
        %v1935 = vadd.f32 %v395, %v1758
        %v1936 = vadd.f32 %v396, %v1248
        %v1937 = vadd.f32 %v397, %v1250
        %v1938 = vadd.f32 %v398, %v1762
        %v1939 = vadd.f32 %v399, %v1764
        %v1940 = vadd.f32 %v400, %v1254
        %v1941 = vadd.f32 %v401, %v1256
        %v1942 = vadd.f32 %v402, %v1768
        %v1943 = vadd.f32 %v403, %v1770
        %v1944 = vadd.f32 %v404, %v1260
        %v1945 = vadd.f32 %v405, %v1262
        %v1946 = vadd.f32 %v406, %v1774
        %v1947 = vadd.f32 %v407, %v1776
        %v1948 = vadd.f32 %v408, %v1266
        %v1949 = vadd.f32 %v409, %v1268
        %v1950 = vadd.f32 %v410, %v1780
        %v1951 = vadd.f32 %v411, %v1782
        %v1952 = vadd.f32 %v412, %v1272
        %v1953 = vadd.f32 %v413, %v1274
        %v1954 = vadd.f32 %v414, %v1786
        %v1955 = vadd.f32 %v415, %v1788
        %v1956 = vadd.f32 %v416, %v1278
        %v1957 = vadd.f32 %v417, %v1280
        %v1958 = vadd.f32 %v418, %v1792
        %v1959 = vadd.f32 %v419, %v1794
        %v1960 = vadd.f32 %v420, %v1284
        %v1961 = vadd.f32 %v421, %v1286
        %v1962 = vadd.f32 %v422, %v1798
        %v1963 = vadd.f32 %v423, %v1800
        %v1964 = vadd.f32 %v424, %v1290
        %v1965 = vadd.f32 %v425, %v1292
        %v1966 = vadd.f32 %v426, %v1804
        %v1967 = vadd.f32 %v427, %v1806
        %v1968 = vadd.f32 %v428, %v1296
        %v1969 = vadd.f32 %v429, %v1298
        %v1970 = vadd.f32 %v430, %v1810
        %v1971 = vadd.f32 %v431, %v1812
        %v1972 = vadd.f32 %v432, %v1302
        %v1973 = vadd.f32 %v433, %v1304
        %v1974 = vadd.f32 %v434, %v1816
        %v1975 = vadd.f32 %v435, %v1818
        %v1976 = vadd.f32 %v436, %v1308
        %v1977 = vadd.f32 %v437, %v1310
        %v1978 = vadd.f32 %v438, %v1822
        %v1979 = vadd.f32 %v439, %v1824
        %v1980 = vadd.f32 %v440, %v1314
        %v1981 = vadd.f32 %v441, %v1316
        %v1982 = vadd.f32 %v442, %v1828
        %v1983 = vadd.f32 %v443, %v1830
        %v1984 = vadd.f32 %v444, %v1320
        %v1985 = vadd.f32 %v445, %v1322
        %v1986 = vadd.f32 %v446, %v1834
        %v1987 = vadd.f32 %v447, %v1836
        %v1988 = vadd.f32 %v448, %v1326
        %v1989 = vadd.f32 %v449, %v1328
        %v1990 = vadd.f32 %v450, %v1840
        %v1991 = vadd.f32 %v451, %v1842
        %v1992 = vadd.f32 %v452, %v1332
        %v1993 = vadd.f32 %v453, %v1334
        %v1994 = vadd.f32 %v454, %v1846
        %v1995 = vadd.f32 %v455, %v1848
        %v1996 = vadd.f32 %v456, %v1338
        %v1997 = vadd.f32 %v457, %v1340
        %v1998 = vadd.f32 %v458, %v1852
        %v1999 = vadd.f32 %v459, %v1854
        %v2000 = vadd.f32 %v460, %v1344
        %v2001 = vadd.f32 %v461, %v1346
        %v2002 = vadd.f32 %v462, %v1858
        %v2003 = vadd.f32 %v463, %v1860
        %v2004 = vadd.f32 %v464, %v1350
        %v2005 = vadd.f32 %v465, %v1352
        %v2006 = vadd.f32 %v466, %v1864
        %v2007 = vadd.f32 %v467, %v1866
        %v2008 = vadd.f32 %v468, %v1356
        %v2009 = vadd.f32 %v469, %v1358
        %v2010 = vadd.f32 %v470, %v1870
        %v2011 = vadd.f32 %v471, %v1872
        %v2012 = vadd.f32 %v472, %v1362
        %v2013 = vadd.f32 %v473, %v1364
        %v2014 = vadd.f32 %v474, %v1876
        %v2015 = vadd.f32 %v475, %v1878
        %v2016 = vadd.f32 %v476, %v1368
        %v2017 = vadd.f32 %v477, %v1370
        %v2018 = vadd.f32 %v478, %v1882
        %v2019 = vadd.f32 %v479, %v1884
        %v2020 = vadd.f32 %v480, %v1374
        %v2021 = vadd.f32 %v481, %v1376
        %v2022 = vadd.f32 %v482, %v1888
        %v2023 = vadd.f32 %v483, %v1890
        %v2024 = vadd.f32 %v484, %v1380
        %v2025 = vadd.f32 %v485, %v1382
        %v2026 = vadd.f32 %v486, %v1894
        %v2027 = vadd.f32 %v487, %v1896
        %v2028 = vadd.f32 %v488, %v1386
        %v2029 = vadd.f32 %v489, %v1388
        %v2030 = vadd.f32 %v490, %v1900
        %v2031 = vadd.f32 %v491, %v1902
        %2032 = vst [vmem:[#allocation2] sm:$0xff] %v1904
        %2033 = vst [vmem:[#allocation2 + $0x8] sm:$0xff] %v1905
        %2034 = vst [vmem:[#allocation2 + $0x10] sm:$0xff] %v1906
        %2035 = vst [vmem:[#allocation2 + $0x18] sm:$0xff] %v1907
        %2036 = vst [vmem:[#allocation2 + $0x20] sm:$0xff] %v1908
        %2037 = vst [vmem:[#allocation2 + $0x28] sm:$0xff] %v1909
        %2038 = vst [vmem:[#allocation2 + $0x30] sm:$0xff] %v1910
        %2039 = vst [vmem:[#allocation2 + $0x38] sm:$0xff] %v1911
        %2040 = vst [vmem:[#allocation2 + $0x40] sm:$0xff] %v1912
        %2041 = vst [vmem:[#allocation2 + $0x48] sm:$0xff] %v1913
        %2042 = vst [vmem:[#allocation2 + $0x50] sm:$0xff] %v1914
        %2043 = vst [vmem:[#allocation2 + $0x58] sm:$0xff] %v1915
        %2044 = vst [vmem:[#allocation2 + $0x60] sm:$0xff] %v1916
        %2045 = vst [vmem:[#allocation2 + $0x68] sm:$0xff] %v1917
        %2046 = vst [vmem:[#allocation2 + $0x70] sm:$0xff] %v1918
        %2047 = vst [vmem:[#allocation2 + $0x78] sm:$0xff] %v1919
        %2048 = vst [vmem:[#allocation2 + $0x80] sm:$0xff] %v1920
        %2049 = vst [vmem:[#allocation2 + $0x88] sm:$0xff] %v1921
        %2050 = vst [vmem:[#allocation2 + $0x90] sm:$0xff] %v1922
        %2051 = vst [vmem:[#allocation2 + $0x98] sm:$0xff] %v1923
        %2052 = vst [vmem:[#allocation2 + $0xa0] sm:$0xff] %v1924
        %2053 = vst [vmem:[#allocation2 + $0xa8] sm:$0xff] %v1925
        %2054 = vst [vmem:[#allocation2 + $0xb0] sm:$0xff] %v1926
        %2055 = vst [vmem:[#allocation2 + $0xb8] sm:$0xff] %v1927
        %2056 = vst [vmem:[#allocation2 + $0xc0] sm:$0xff] %v1928
        %2057 = vst [vmem:[#allocation2 + $0xc8] sm:$0xff] %v1929
        %2058 = vst [vmem:[#allocation2 + $0xd0] sm:$0xff] %v1930
        %2059 = vst [vmem:[#allocation2 + $0xd8] sm:$0xff] %v1931
        %2060 = vst [vmem:[#allocation2 + $0xe0] sm:$0xff] %v1932
        %2061 = vst [vmem:[#allocation2 + $0xe8] sm:$0xff] %v1933
        %2062 = vst [vmem:[#allocation2 + $0xf0] sm:$0xff] %v1934
        %2063 = vst [vmem:[#allocation2 + $0xf8] sm:$0xff] %v1935
        %2064 = vst [vmem:[#allocation2 + $0x100] sm:$0xff] %v1936
        %2065 = vst [vmem:[#allocation2 + $0x108] sm:$0xff] %v1937
        %2066 = vst [vmem:[#allocation2 + $0x110] sm:$0xff] %v1938
        %2067 = vst [vmem:[#allocation2 + $0x118] sm:$0xff] %v1939
        %2068 = vst [vmem:[#allocation2 + $0x120] sm:$0xff] %v1940
        %2069 = vst [vmem:[#allocation2 + $0x128] sm:$0xff] %v1941
        %2070 = vst [vmem:[#allocation2 + $0x130] sm:$0xff] %v1942
        %2071 = vst [vmem:[#allocation2 + $0x138] sm:$0xff] %v1943
        %2072 = vst [vmem:[#allocation2 + $0x140] sm:$0xff] %v1944
        %2073 = vst [vmem:[#allocation2 + $0x148] sm:$0xff] %v1945
        %2074 = vst [vmem:[#allocation2 + $0x150] sm:$0xff] %v1946
        %2075 = vst [vmem:[#allocation2 + $0x158] sm:$0xff] %v1947
        %2076 = vst [vmem:[#allocation2 + $0x160] sm:$0xff] %v1948
        %2077 = vst [vmem:[#allocation2 + $0x168] sm:$0xff] %v1949
        %2078 = vst [vmem:[#allocation2 + $0x170] sm:$0xff] %v1950
        %2079 = vst [vmem:[#allocation2 + $0x178] sm:$0xff] %v1951
        %2080 = vst [vmem:[#allocation2 + $0x180] sm:$0xff] %v1952
        %2081 = vst [vmem:[#allocation2 + $0x188] sm:$0xff] %v1953
        %2082 = vst [vmem:[#allocation2 + $0x190] sm:$0xff] %v1954
        %2083 = vst [vmem:[#allocation2 + $0x198] sm:$0xff] %v1955
        %2084 = vst [vmem:[#allocation2 + $0x1a0] sm:$0xff] %v1956
        %2085 = vst [vmem:[#allocation2 + $0x1a8] sm:$0xff] %v1957
        %2086 = vst [vmem:[#allocation2 + $0x1b0] sm:$0xff] %v1958
        %2087 = vst [vmem:[#allocation2 + $0x1b8] sm:$0xff] %v1959
        %2088 = vst [vmem:[#allocation2 + $0x1c0] sm:$0xff] %v1960
        %2089 = vst [vmem:[#allocation2 + $0x1c8] sm:$0xff] %v1961
        %2090 = vst [vmem:[#allocation2 + $0x1d0] sm:$0xff] %v1962
        %2091 = vst [vmem:[#allocation2 + $0x1d8] sm:$0xff] %v1963
        %2092 = vst [vmem:[#allocation2 + $0x1e0] sm:$0xff] %v1964
        %2093 = vst [vmem:[#allocation2 + $0x1e8] sm:$0xff] %v1965
        %2094 = vst [vmem:[#allocation2 + $0x1f0] sm:$0xff] %v1966
        %2095 = vst [vmem:[#allocation2 + $0x1f8] sm:$0xff] %v1967
        %2096 = vst [vmem:[#allocation2 + $0x200] sm:$0xff] %v1968
        %2097 = vst [vmem:[#allocation2 + $0x208] sm:$0xff] %v1969
        %2098 = vst [vmem:[#allocation2 + $0x210] sm:$0xff] %v1970
        %2099 = vst [vmem:[#allocation2 + $0x218] sm:$0xff] %v1971
        %2100 = vst [vmem:[#allocation2 + $0x220] sm:$0xff] %v1972
        %2101 = vst [vmem:[#allocation2 + $0x228] sm:$0xff] %v1973
        %2102 = vst [vmem:[#allocation2 + $0x230] sm:$0xff] %v1974
        %2103 = vst [vmem:[#allocation2 + $0x238] sm:$0xff] %v1975
        %2104 = vst [vmem:[#allocation2 + $0x240] sm:$0xff] %v1976
        %2105 = vst [vmem:[#allocation2 + $0x248] sm:$0xff] %v1977
        %2106 = vst [vmem:[#allocation2 + $0x250] sm:$0xff] %v1978
        %2107 = vst [vmem:[#allocation2 + $0x258] sm:$0xff] %v1979
        %2108 = vst [vmem:[#allocation2 + $0x260] sm:$0xff] %v1980
        %2109 = vst [vmem:[#allocation2 + $0x268] sm:$0xff] %v1981
        %2110 = vst [vmem:[#allocation2 + $0x270] sm:$0xff] %v1982
        %2111 = vst [vmem:[#allocation2 + $0x278] sm:$0xff] %v1983
        %2112 = vst [vmem:[#allocation2 + $0x280] sm:$0xff] %v1984
        %2113 = vst [vmem:[#allocation2 + $0x288] sm:$0xff] %v1985
        %2114 = vst [vmem:[#allocation2 + $0x290] sm:$0xff] %v1986
        %2115 = vst [vmem:[#allocation2 + $0x298] sm:$0xff] %v1987
        %2116 = vst [vmem:[#allocation2 + $0x2a0] sm:$0xff] %v1988
        %2117 = vst [vmem:[#allocation2 + $0x2a8] sm:$0xff] %v1989
        %2118 = vst [vmem:[#allocation2 + $0x2b0] sm:$0xff] %v1990
        %2119 = vst [vmem:[#allocation2 + $0x2b8] sm:$0xff] %v1991
        %2120 = vst [vmem:[#allocation2 + $0x2c0] sm:$0xff] %v1992
        %2121 = vst [vmem:[#allocation2 + $0x2c8] sm:$0xff] %v1993
        %2122 = vst [vmem:[#allocation2 + $0x2d0] sm:$0xff] %v1994
        %2123 = vst [vmem:[#allocation2 + $0x2d8] sm:$0xff] %v1995
        %2124 = vst [vmem:[#allocation2 + $0x2e0] sm:$0xff] %v1996
        %2125 = vst [vmem:[#allocation2 + $0x2e8] sm:$0xff] %v1997
        %2126 = vst [vmem:[#allocation2 + $0x2f0] sm:$0xff] %v1998
        %2127 = vst [vmem:[#allocation2 + $0x2f8] sm:$0xff] %v1999
        %2128 = vst [vmem:[#allocation2 + $0x300] sm:$0xff] %v2000
        %2129 = vst [vmem:[#allocation2 + $0x308] sm:$0xff] %v2001
        %2130 = vst [vmem:[#allocation2 + $0x310] sm:$0xff] %v2002
        %2131 = vst [vmem:[#allocation2 + $0x318] sm:$0xff] %v2003
        %2132 = vst [vmem:[#allocation2 + $0x320] sm:$0xff] %v2004
        %2133 = vst [vmem:[#allocation2 + $0x328] sm:$0xff] %v2005
        %2134 = vst [vmem:[#allocation2 + $0x330] sm:$0xff] %v2006
        %2135 = vst [vmem:[#allocation2 + $0x338] sm:$0xff] %v2007
        %2136 = vst [vmem:[#allocation2 + $0x340] sm:$0xff] %v2008
        %2137 = vst [vmem:[#allocation2 + $0x348] sm:$0xff] %v2009
        %2138 = vst [vmem:[#allocation2 + $0x350] sm:$0xff] %v2010
        %2139 = vst [vmem:[#allocation2 + $0x358] sm:$0xff] %v2011
        %2140 = vst [vmem:[#allocation2 + $0x360] sm:$0xff] %v2012
        %2141 = vst [vmem:[#allocation2 + $0x368] sm:$0xff] %v2013
        %2142 = vst [vmem:[#allocation2 + $0x370] sm:$0xff] %v2014
        %2143 = vst [vmem:[#allocation2 + $0x378] sm:$0xff] %v2015
        %2144 = vst [vmem:[#allocation2 + $0x380] sm:$0xff] %v2016
        %2145 = vst [vmem:[#allocation2 + $0x388] sm:$0xff] %v2017
        %2146 = vst [vmem:[#allocation2 + $0x390] sm:$0xff] %v2018
        %2147 = vst [vmem:[#allocation2 + $0x398] sm:$0xff] %v2019
        %2148 = vst [vmem:[#allocation2 + $0x3a0] sm:$0xff] %v2020
        %2149 = vst [vmem:[#allocation2 + $0x3a8] sm:$0xff] %v2021
        %2150 = vst [vmem:[#allocation2 + $0x3b0] sm:$0xff] %v2022
        %2151 = vst [vmem:[#allocation2 + $0x3b8] sm:$0xff] %v2023
        %2152 = vst [vmem:[#allocation2 + $0x3c0] sm:$0xff] %v2024
        %2153 = vst [vmem:[#allocation2 + $0x3c8] sm:$0xff] %v2025
        %2154 = vst [vmem:[#allocation2 + $0x3d0] sm:$0xff] %v2026
        %2155 = vst [vmem:[#allocation2 + $0x3d8] sm:$0xff] %v2027
        %2156 = vst [vmem:[#allocation2 + $0x3e0] sm:$0xff] %v2028
        %2157 = vst [vmem:[#allocation2 + $0x3e8] sm:$0xff] %v2029
        %2158 = vst [vmem:[#allocation2 + $0x3f0] sm:$0xff] %v2030
        %2159 = vst [vmem:[#allocation2 + $0x3f8] sm:$0xff] %v2031
        %p2160 = scmp.eq.s32.totalorder %s27, 1
        // Predicated region
        $region41: #{tpu_custom_call.1} parent=27 // pred_check
          %p2161 = pneg %p2160
        $region42: #{tpu_custom_call.1} parent=27 // pred_check_branch
          %2163 = sbr.rel (%p2161) target = $region44
        $region43: #{tpu_custom_call.1} parent=27 // pred_region
          %v2164 = vld [vmem:[#allocation2] sm:$0xff]
          %v2165 = vld [vmem:[#allocation2 + $0x8] sm:$0xff]
          %v2166 = vld [vmem:[#allocation2 + $0x10] sm:$0xff]
          %v2167 = vld [vmem:[#allocation2 + $0x18] sm:$0xff]
          %v2168 = vld [vmem:[#allocation2 + $0x20] sm:$0xff]
          %v2169 = vld [vmem:[#allocation2 + $0x28] sm:$0xff]
          %v2170 = vld [vmem:[#allocation2 + $0x30] sm:$0xff]
          %v2171 = vld [vmem:[#allocation2 + $0x38] sm:$0xff]
          %v2172 = vld [vmem:[#allocation2 + $0x40] sm:$0xff]
          %v2173 = vld [vmem:[#allocation2 + $0x48] sm:$0xff]
          %v2174 = vld [vmem:[#allocation2 + $0x50] sm:$0xff]
          %v2175 = vld [vmem:[#allocation2 + $0x58] sm:$0xff]
          %v2176 = vld [vmem:[#allocation2 + $0x60] sm:$0xff]
          %v2177 = vld [vmem:[#allocation2 + $0x68] sm:$0xff]
          %v2178 = vld [vmem:[#allocation2 + $0x70] sm:$0xff]
          %v2179 = vld [vmem:[#allocation2 + $0x78] sm:$0xff]
          %v2180 = vld [vmem:[#allocation2 + $0x80] sm:$0xff]
          %v2181 = vld [vmem:[#allocation2 + $0x88] sm:$0xff]
          %v2182 = vld [vmem:[#allocation2 + $0x90] sm:$0xff]
          %v2183 = vld [vmem:[#allocation2 + $0x98] sm:$0xff]
          %v2184 = vld [vmem:[#allocation2 + $0xa0] sm:$0xff]
          %v2185 = vld [vmem:[#allocation2 + $0xa8] sm:$0xff]
          %v2186 = vld [vmem:[#allocation2 + $0xb0] sm:$0xff]
          %v2187 = vld [vmem:[#allocation2 + $0xb8] sm:$0xff]
          %v2188 = vld [vmem:[#allocation2 + $0xc0] sm:$0xff]
          %v2189 = vld [vmem:[#allocation2 + $0xc8] sm:$0xff]
          %v2190 = vld [vmem:[#allocation2 + $0xd0] sm:$0xff]
          %v2191 = vld [vmem:[#allocation2 + $0xd8] sm:$0xff]
          %v2192 = vld [vmem:[#allocation2 + $0xe0] sm:$0xff]
          %v2193 = vld [vmem:[#allocation2 + $0xe8] sm:$0xff]
          %v2194 = vld [vmem:[#allocation2 + $0xf0] sm:$0xff]
          %v2195 = vld [vmem:[#allocation2 + $0xf8] sm:$0xff]
          %v2196 = vld [vmem:[#allocation2 + $0x100] sm:$0xff]
          %v2197 = vld [vmem:[#allocation2 + $0x108] sm:$0xff]
          %v2198 = vld [vmem:[#allocation2 + $0x110] sm:$0xff]
          %v2199 = vld [vmem:[#allocation2 + $0x118] sm:$0xff]
          %v2200 = vld [vmem:[#allocation2 + $0x120] sm:$0xff]
          %v2201 = vld [vmem:[#allocation2 + $0x128] sm:$0xff]
          %v2202 = vld [vmem:[#allocation2 + $0x130] sm:$0xff]
          %v2203 = vld [vmem:[#allocation2 + $0x138] sm:$0xff]
          %v2204 = vld [vmem:[#allocation2 + $0x140] sm:$0xff]
          %v2205 = vld [vmem:[#allocation2 + $0x148] sm:$0xff]
          %v2206 = vld [vmem:[#allocation2 + $0x150] sm:$0xff]
          %v2207 = vld [vmem:[#allocation2 + $0x158] sm:$0xff]
          %v2208 = vld [vmem:[#allocation2 + $0x160] sm:$0xff]
          %v2209 = vld [vmem:[#allocation2 + $0x168] sm:$0xff]
          %v2210 = vld [vmem:[#allocation2 + $0x170] sm:$0xff]
          %v2211 = vld [vmem:[#allocation2 + $0x178] sm:$0xff]
          %v2212 = vld [vmem:[#allocation2 + $0x180] sm:$0xff]
          %v2213 = vld [vmem:[#allocation2 + $0x188] sm:$0xff]
          %v2214 = vld [vmem:[#allocation2 + $0x190] sm:$0xff]
          %v2215 = vld [vmem:[#allocation2 + $0x198] sm:$0xff]
          %v2216 = vld [vmem:[#allocation2 + $0x1a0] sm:$0xff]
          %v2217 = vld [vmem:[#allocation2 + $0x1a8] sm:$0xff]
          %v2218 = vld [vmem:[#allocation2 + $0x1b0] sm:$0xff]
          %v2219 = vld [vmem:[#allocation2 + $0x1b8] sm:$0xff]
          %v2220 = vld [vmem:[#allocation2 + $0x1c0] sm:$0xff]
          %v2221 = vld [vmem:[#allocation2 + $0x1c8] sm:$0xff]
          %v2222 = vld [vmem:[#allocation2 + $0x1d0] sm:$0xff]
          %v2223 = vld [vmem:[#allocation2 + $0x1d8] sm:$0xff]
          %v2224 = vld [vmem:[#allocation2 + $0x1e0] sm:$0xff]
          %v2225 = vld [vmem:[#allocation2 + $0x1e8] sm:$0xff]
          %v2226 = vld [vmem:[#allocation2 + $0x1f0] sm:$0xff]
          %v2227 = vld [vmem:[#allocation2 + $0x1f8] sm:$0xff]
          %v2228 = vld [vmem:[#allocation2 + $0x200] sm:$0xff]
          %v2229 = vld [vmem:[#allocation2 + $0x208] sm:$0xff]
          %v2230 = vld [vmem:[#allocation2 + $0x210] sm:$0xff]
          %v2231 = vld [vmem:[#allocation2 + $0x218] sm:$0xff]
          %v2232 = vld [vmem:[#allocation2 + $0x220] sm:$0xff]
          %v2233 = vld [vmem:[#allocation2 + $0x228] sm:$0xff]
          %v2234 = vld [vmem:[#allocation2 + $0x230] sm:$0xff]
          %v2235 = vld [vmem:[#allocation2 + $0x238] sm:$0xff]
          %v2236 = vld [vmem:[#allocation2 + $0x240] sm:$0xff]
          %v2237 = vld [vmem:[#allocation2 + $0x248] sm:$0xff]
          %v2238 = vld [vmem:[#allocation2 + $0x250] sm:$0xff]
          %v2239 = vld [vmem:[#allocation2 + $0x258] sm:$0xff]
          %v2240 = vld [vmem:[#allocation2 + $0x260] sm:$0xff]
          %v2241 = vld [vmem:[#allocation2 + $0x268] sm:$0xff]
          %v2242 = vld [vmem:[#allocation2 + $0x270] sm:$0xff]
          %v2243 = vld [vmem:[#allocation2 + $0x278] sm:$0xff]
          %v2244 = vld [vmem:[#allocation2 + $0x280] sm:$0xff]
          %v2245 = vld [vmem:[#allocation2 + $0x288] sm:$0xff]
          %v2246 = vld [vmem:[#allocation2 + $0x290] sm:$0xff]
          %v2247 = vld [vmem:[#allocation2 + $0x298] sm:$0xff]
          %v2248 = vld [vmem:[#allocation2 + $0x2a0] sm:$0xff]
          %v2249 = vld [vmem:[#allocation2 + $0x2a8] sm:$0xff]
          %v2250 = vld [vmem:[#allocation2 + $0x2b0] sm:$0xff]
          %v2251 = vld [vmem:[#allocation2 + $0x2b8] sm:$0xff]
          %v2252 = vld [vmem:[#allocation2 + $0x2c0] sm:$0xff]
          %v2253 = vld [vmem:[#allocation2 + $0x2c8] sm:$0xff]
          %v2254 = vld [vmem:[#allocation2 + $0x2d0] sm:$0xff]
          %v2255 = vld [vmem:[#allocation2 + $0x2d8] sm:$0xff]
          %v2256 = vld [vmem:[#allocation2 + $0x2e0] sm:$0xff]
          %v2257 = vld [vmem:[#allocation2 + $0x2e8] sm:$0xff]
          %v2258 = vld [vmem:[#allocation2 + $0x2f0] sm:$0xff]
          %v2259 = vld [vmem:[#allocation2 + $0x2f8] sm:$0xff]
          %v2260 = vld [vmem:[#allocation2 + $0x300] sm:$0xff]
          %v2261 = vld [vmem:[#allocation2 + $0x308] sm:$0xff]
          %v2262 = vld [vmem:[#allocation2 + $0x310] sm:$0xff]
          %v2263 = vld [vmem:[#allocation2 + $0x318] sm:$0xff]
          %v2264 = vld [vmem:[#allocation2 + $0x320] sm:$0xff]
          %v2265 = vld [vmem:[#allocation2 + $0x328] sm:$0xff]
          %v2266 = vld [vmem:[#allocation2 + $0x330] sm:$0xff]
          %v2267 = vld [vmem:[#allocation2 + $0x338] sm:$0xff]
          %v2268 = vld [vmem:[#allocation2 + $0x340] sm:$0xff]
          %v2269 = vld [vmem:[#allocation2 + $0x348] sm:$0xff]
          %v2270 = vld [vmem:[#allocation2 + $0x350] sm:$0xff]
          %v2271 = vld [vmem:[#allocation2 + $0x358] sm:$0xff]
          %v2272 = vld [vmem:[#allocation2 + $0x360] sm:$0xff]
          %v2273 = vld [vmem:[#allocation2 + $0x368] sm:$0xff]
          %v2274 = vld [vmem:[#allocation2 + $0x370] sm:$0xff]
          %v2275 = vld [vmem:[#allocation2 + $0x378] sm:$0xff]
          %v2276 = vld [vmem:[#allocation2 + $0x380] sm:$0xff]
          %v2277 = vld [vmem:[#allocation2 + $0x388] sm:$0xff]
          %v2278 = vld [vmem:[#allocation2 + $0x390] sm:$0xff]
          %v2279 = vld [vmem:[#allocation2 + $0x398] sm:$0xff]
          %v2280 = vld [vmem:[#allocation2 + $0x3a0] sm:$0xff]
          %v2281 = vld [vmem:[#allocation2 + $0x3a8] sm:$0xff]
          %v2282 = vld [vmem:[#allocation2 + $0x3b0] sm:$0xff]
          %v2283 = vld [vmem:[#allocation2 + $0x3b8] sm:$0xff]
          %v2284 = vld [vmem:[#allocation2 + $0x3c0] sm:$0xff]
          %v2285 = vld [vmem:[#allocation2 + $0x3c8] sm:$0xff]
          %v2286 = vld [vmem:[#allocation2 + $0x3d0] sm:$0xff]
          %v2287 = vld [vmem:[#allocation2 + $0x3d8] sm:$0xff]
          %v2288 = vld [vmem:[#allocation2 + $0x3e0] sm:$0xff]
          %v2289 = vld [vmem:[#allocation2 + $0x3e8] sm:$0xff]
          %v2290 = vld [vmem:[#allocation2 + $0x3f0] sm:$0xff]
          %v2291 = vld [vmem:[#allocation2 + $0x3f8] sm:$0xff]
          %2292 = vst [vmem:[#allocation8] sm:$0xff] %v2164
          %2293 = vst [vmem:[#allocation8 + $0x8] sm:$0xff] %v2165
          %2294 = vst [vmem:[#allocation8 + $0x10] sm:$0xff] %v2166
          %2295 = vst [vmem:[#allocation8 + $0x18] sm:$0xff] %v2167
          %2296 = vst [vmem:[#allocation8 + $0x20] sm:$0xff] %v2168
          %2297 = vst [vmem:[#allocation8 + $0x28] sm:$0xff] %v2169
          %2298 = vst [vmem:[#allocation8 + $0x30] sm:$0xff] %v2170
          %2299 = vst [vmem:[#allocation8 + $0x38] sm:$0xff] %v2171
          %2300 = vst [vmem:[#allocation8 + $0x40] sm:$0xff] %v2172
          %2301 = vst [vmem:[#allocation8 + $0x48] sm:$0xff] %v2173
          %2302 = vst [vmem:[#allocation8 + $0x50] sm:$0xff] %v2174
          %2303 = vst [vmem:[#allocation8 + $0x58] sm:$0xff] %v2175
          %2304 = vst [vmem:[#allocation8 + $0x60] sm:$0xff] %v2176
          %2305 = vst [vmem:[#allocation8 + $0x68] sm:$0xff] %v2177
          %2306 = vst [vmem:[#allocation8 + $0x70] sm:$0xff] %v2178
          %2307 = vst [vmem:[#allocation8 + $0x78] sm:$0xff] %v2179
          %2308 = vst [vmem:[#allocation8 + $0x80] sm:$0xff] %v2180
          %2309 = vst [vmem:[#allocation8 + $0x88] sm:$0xff] %v2181
          %2310 = vst [vmem:[#allocation8 + $0x90] sm:$0xff] %v2182
          %2311 = vst [vmem:[#allocation8 + $0x98] sm:$0xff] %v2183
          %2312 = vst [vmem:[#allocation8 + $0xa0] sm:$0xff] %v2184
          %2313 = vst [vmem:[#allocation8 + $0xa8] sm:$0xff] %v2185
          %2314 = vst [vmem:[#allocation8 + $0xb0] sm:$0xff] %v2186
          %2315 = vst [vmem:[#allocation8 + $0xb8] sm:$0xff] %v2187
          %2316 = vst [vmem:[#allocation8 + $0xc0] sm:$0xff] %v2188
          %2317 = vst [vmem:[#allocation8 + $0xc8] sm:$0xff] %v2189
          %2318 = vst [vmem:[#allocation8 + $0xd0] sm:$0xff] %v2190
          %2319 = vst [vmem:[#allocation8 + $0xd8] sm:$0xff] %v2191
          %2320 = vst [vmem:[#allocation8 + $0xe0] sm:$0xff] %v2192
          %2321 = vst [vmem:[#allocation8 + $0xe8] sm:$0xff] %v2193
          %2322 = vst [vmem:[#allocation8 + $0xf0] sm:$0xff] %v2194
          %2323 = vst [vmem:[#allocation8 + $0xf8] sm:$0xff] %v2195
          %2324 = vst [vmem:[#allocation8 + $0x100] sm:$0xff] %v2196
          %2325 = vst [vmem:[#allocation8 + $0x108] sm:$0xff] %v2197
          %2326 = vst [vmem:[#allocation8 + $0x110] sm:$0xff] %v2198
          %2327 = vst [vmem:[#allocation8 + $0x118] sm:$0xff] %v2199
          %2328 = vst [vmem:[#allocation8 + $0x120] sm:$0xff] %v2200
          %2329 = vst [vmem:[#allocation8 + $0x128] sm:$0xff] %v2201
          %2330 = vst [vmem:[#allocation8 + $0x130] sm:$0xff] %v2202
          %2331 = vst [vmem:[#allocation8 + $0x138] sm:$0xff] %v2203
          %2332 = vst [vmem:[#allocation8 + $0x140] sm:$0xff] %v2204
          %2333 = vst [vmem:[#allocation8 + $0x148] sm:$0xff] %v2205
          %2334 = vst [vmem:[#allocation8 + $0x150] sm:$0xff] %v2206
          %2335 = vst [vmem:[#allocation8 + $0x158] sm:$0xff] %v2207
          %2336 = vst [vmem:[#allocation8 + $0x160] sm:$0xff] %v2208
          %2337 = vst [vmem:[#allocation8 + $0x168] sm:$0xff] %v2209
          %2338 = vst [vmem:[#allocation8 + $0x170] sm:$0xff] %v2210
          %2339 = vst [vmem:[#allocation8 + $0x178] sm:$0xff] %v2211
          %2340 = vst [vmem:[#allocation8 + $0x180] sm:$0xff] %v2212
          %2341 = vst [vmem:[#allocation8 + $0x188] sm:$0xff] %v2213
          %2342 = vst [vmem:[#allocation8 + $0x190] sm:$0xff] %v2214
          %2343 = vst [vmem:[#allocation8 + $0x198] sm:$0xff] %v2215
          %2344 = vst [vmem:[#allocation8 + $0x1a0] sm:$0xff] %v2216
          %2345 = vst [vmem:[#allocation8 + $0x1a8] sm:$0xff] %v2217
          %2346 = vst [vmem:[#allocation8 + $0x1b0] sm:$0xff] %v2218
          %2347 = vst [vmem:[#allocation8 + $0x1b8] sm:$0xff] %v2219
          %2348 = vst [vmem:[#allocation8 + $0x1c0] sm:$0xff] %v2220
          %2349 = vst [vmem:[#allocation8 + $0x1c8] sm:$0xff] %v2221
          %2350 = vst [vmem:[#allocation8 + $0x1d0] sm:$0xff] %v2222
          %2351 = vst [vmem:[#allocation8 + $0x1d8] sm:$0xff] %v2223
          %2352 = vst [vmem:[#allocation8 + $0x1e0] sm:$0xff] %v2224
          %2353 = vst [vmem:[#allocation8 + $0x1e8] sm:$0xff] %v2225
          %2354 = vst [vmem:[#allocation8 + $0x1f0] sm:$0xff] %v2226
          %2355 = vst [vmem:[#allocation8 + $0x1f8] sm:$0xff] %v2227
          %2356 = vst [vmem:[#allocation8 + $0x200] sm:$0xff] %v2228
          %2357 = vst [vmem:[#allocation8 + $0x208] sm:$0xff] %v2229
          %2358 = vst [vmem:[#allocation8 + $0x210] sm:$0xff] %v2230
          %2359 = vst [vmem:[#allocation8 + $0x218] sm:$0xff] %v2231
          %2360 = vst [vmem:[#allocation8 + $0x220] sm:$0xff] %v2232
          %2361 = vst [vmem:[#allocation8 + $0x228] sm:$0xff] %v2233
          %2362 = vst [vmem:[#allocation8 + $0x230] sm:$0xff] %v2234
          %2363 = vst [vmem:[#allocation8 + $0x238] sm:$0xff] %v2235
          %2364 = vst [vmem:[#allocation8 + $0x240] sm:$0xff] %v2236
          %2365 = vst [vmem:[#allocation8 + $0x248] sm:$0xff] %v2237
          %2366 = vst [vmem:[#allocation8 + $0x250] sm:$0xff] %v2238
          %2367 = vst [vmem:[#allocation8 + $0x258] sm:$0xff] %v2239
          %2368 = vst [vmem:[#allocation8 + $0x260] sm:$0xff] %v2240
          %2369 = vst [vmem:[#allocation8 + $0x268] sm:$0xff] %v2241
          %2370 = vst [vmem:[#allocation8 + $0x270] sm:$0xff] %v2242
          %2371 = vst [vmem:[#allocation8 + $0x278] sm:$0xff] %v2243
          %2372 = vst [vmem:[#allocation8 + $0x280] sm:$0xff] %v2244
          %2373 = vst [vmem:[#allocation8 + $0x288] sm:$0xff] %v2245
          %2374 = vst [vmem:[#allocation8 + $0x290] sm:$0xff] %v2246
          %2375 = vst [vmem:[#allocation8 + $0x298] sm:$0xff] %v2247
          %2376 = vst [vmem:[#allocation8 + $0x2a0] sm:$0xff] %v2248
          %2377 = vst [vmem:[#allocation8 + $0x2a8] sm:$0xff] %v2249
          %2378 = vst [vmem:[#allocation8 + $0x2b0] sm:$0xff] %v2250
          %2379 = vst [vmem:[#allocation8 + $0x2b8] sm:$0xff] %v2251
          %2380 = vst [vmem:[#allocation8 + $0x2c0] sm:$0xff] %v2252
          %2381 = vst [vmem:[#allocation8 + $0x2c8] sm:$0xff] %v2253
          %2382 = vst [vmem:[#allocation8 + $0x2d0] sm:$0xff] %v2254
          %2383 = vst [vmem:[#allocation8 + $0x2d8] sm:$0xff] %v2255
          %2384 = vst [vmem:[#allocation8 + $0x2e0] sm:$0xff] %v2256
          %2385 = vst [vmem:[#allocation8 + $0x2e8] sm:$0xff] %v2257
          %2386 = vst [vmem:[#allocation8 + $0x2f0] sm:$0xff] %v2258
          %2387 = vst [vmem:[#allocation8 + $0x2f8] sm:$0xff] %v2259
          %2388 = vst [vmem:[#allocation8 + $0x300] sm:$0xff] %v2260
          %2389 = vst [vmem:[#allocation8 + $0x308] sm:$0xff] %v2261
          %2390 = vst [vmem:[#allocation8 + $0x310] sm:$0xff] %v2262
          %2391 = vst [vmem:[#allocation8 + $0x318] sm:$0xff] %v2263
          %2392 = vst [vmem:[#allocation8 + $0x320] sm:$0xff] %v2264
          %2393 = vst [vmem:[#allocation8 + $0x328] sm:$0xff] %v2265
          %2394 = vst [vmem:[#allocation8 + $0x330] sm:$0xff] %v2266
          %2395 = vst [vmem:[#allocation8 + $0x338] sm:$0xff] %v2267
          %2396 = vst [vmem:[#allocation8 + $0x340] sm:$0xff] %v2268
          %2397 = vst [vmem:[#allocation8 + $0x348] sm:$0xff] %v2269
          %2398 = vst [vmem:[#allocation8 + $0x350] sm:$0xff] %v2270
          %2399 = vst [vmem:[#allocation8 + $0x358] sm:$0xff] %v2271
          %2400 = vst [vmem:[#allocation8 + $0x360] sm:$0xff] %v2272
          %2401 = vst [vmem:[#allocation8 + $0x368] sm:$0xff] %v2273
          %2402 = vst [vmem:[#allocation8 + $0x370] sm:$0xff] %v2274
          %2403 = vst [vmem:[#allocation8 + $0x378] sm:$0xff] %v2275
          %2404 = vst [vmem:[#allocation8 + $0x380] sm:$0xff] %v2276
          %2405 = vst [vmem:[#allocation8 + $0x388] sm:$0xff] %v2277
          %2406 = vst [vmem:[#allocation8 + $0x390] sm:$0xff] %v2278
          %2407 = vst [vmem:[#allocation8 + $0x398] sm:$0xff] %v2279
          %2408 = vst [vmem:[#allocation8 + $0x3a0] sm:$0xff] %v2280
          %2409 = vst [vmem:[#allocation8 + $0x3a8] sm:$0xff] %v2281
          %2410 = vst [vmem:[#allocation8 + $0x3b0] sm:$0xff] %v2282
          %2411 = vst [vmem:[#allocation8 + $0x3b8] sm:$0xff] %v2283
          %2412 = vst [vmem:[#allocation8 + $0x3c0] sm:$0xff] %v2284
          %2413 = vst [vmem:[#allocation8 + $0x3c8] sm:$0xff] %v2285
          %2414 = vst [vmem:[#allocation8 + $0x3d0] sm:$0xff] %v2286
          %2415 = vst [vmem:[#allocation8 + $0x3d8] sm:$0xff] %v2287
          %2416 = vst [vmem:[#allocation8 + $0x3e0] sm:$0xff] %v2288
          %2417 = vst [vmem:[#allocation8 + $0x3e8] sm:$0xff] %v2289
          %2418 = vst [vmem:[#allocation8 + $0x3f0] sm:$0xff] %v2290
          %2419 = vst [vmem:[#allocation8 + $0x3f8] sm:$0xff] %v2291
        $region44: #{tpu_custom_call.1} parent=27 // pred_fallthru
          _
        // Predicated region
        $region45: #{tpu_custom_call.1} parent=27 // pred_check
          %p2420 = pneg %p115
        $region46: #{tpu_custom_call.1} parent=27 // pred_check_branch
          %2422 = sbr.rel (%p2420) target = $region48
        $region47: #{tpu_custom_call.1} parent=27 // pred_region
          %s2423 = smul.u32 32, %s25
          %s2424 = smul.u32 4, %s26
          %s2426 = ssub.s32 16384, 16384
          %2427 = vsyncadd [#allocation5], %s2426
          %s2428 = smul.addr %s2423, 4
          %s2429 = sadd.s32 %s2424, %s2428
          %s2430 = smul.addr %s2429, 128
          %s2431 = scalar_lea.hbm %s2, %s2430
          %s2432 = sshll.u32 [#allocation8], 4
          %s2433 = int_to_ptr.vmem [resolvable:$true] %s2432
          %2438 = dma.vmem_to_hbm [thread:$0]  %s2433, 16384, %s2431, [#allocation5], 512, 512, 32
        $region48: #{tpu_custom_call.1} parent=27 // pred_fallthru
          _
        // Predicated region
        $region49: #{tpu_custom_call.1} parent=27 // pred_check
          %p2439 = pneg %p115
        $region50: #{tpu_custom_call.1} parent=27 // pred_check_branch
          %2441 = sbr.rel (%p2439) target = $region52
        $region51: #{tpu_custom_call.1} parent=27 // pred_region
          %2442 = dma.done [#allocation5], 16384
        $region52: #{tpu_custom_call.1} parent=27 // pred_fallthru
          _
      $region28: #{tpu_custom_call.1} parent=5 // pred_fallthru
        _
      %p2443 = scmp.le.s32.totalorder 2, %s15
      // Predicated region
      $region53: #{tpu_custom_call.1} parent=5 // pred_check
        %p2444 = pneg %p2443
      $region54: #{tpu_custom_call.1} parent=5 // pred_check_branch
        %2446 = sbr.rel (%p2444) target = $region56
      $region55: #{tpu_custom_call.1} parent=5 // pred_region
        %s2447 = ssub.s32 %s15, 2
      $region56: #{tpu_custom_call.1} parent=5 // pred_fallthru
        _
    $region6: #{tpu_custom_call.1} parent=1 // loop_footer
      %s19 = sadd.s32 1, %s15
    $region7: #{tpu_custom_call.1} parent=1 // loop_footer_branch
      %14 = sbr.rel target = $region3
    $region8: #{tpu_custom_call.1} parent=1 // loop_exit
      _
    %2448 = vsyncpa [#allocation4], 1
    %s2449 = scalar_lea.sflag [#allocation4], 1
    %2450 = vsyncpa %s2449, 1
    %2451 = vsyncpa [#allocation7], 1
    %s2452 = scalar_lea.sflag [#allocation7], 1
    %2453 = vsyncpa %s2452, 1
    %2454 = vsyncpa [#allocation5], 1
    %s2455 = scalar_lea.sflag [#allocation5], 1
    %2456 = vsyncpa %s2455, 1

</llo_original>
